<compile_context>
chip_gen: v7x
topology: tpu7x:2x2x1
jax: 0.10.0
libtpu: 0.0.40
codegen_flags: <defaults>
</compile_context>

<pallas_src>
import functools

import jax
import jax.numpy as jnp
from jax import lax
from jax.experimental import pallas as pl
from jax.experimental.pallas import tpu as pltpu

NEG_SLOPE = 0.01   # nn.LeakyReLU default
BN_EPS = 1e-5      # nn.BatchNorm2d default
LANE = 128         # pad channels to multiples of 128 for lane-dense MXU / VPU / stores


def _round_up(x, m):
    return (x + m - 1) // m * m


def _pick_row_tile(h):
    # Largest row tile (<=32) that divides H and gives at least 2 tiles; else the whole image.
    for th in (32, 16, 8):
        if h % th == 0 and h // th >= 2:
            return th
    return h
    # TODO(synk): also tile W (and handle ragged H / in-kernel halo DMA) so the im2col buffer stays
    # bounded for very large images; current tiles comfortably fit v5e's 16 MiB scoped VMEM.


# --------------- Kernel A: 3x3 conv as one im2col matmul + per-tile BN partial sums ---------------
def _conv_stats_kernel(xt_ref, w_ref, out_ref, stats_ref):
    """xt_ref   : (1, 1, th+2, W+2, Cin_p) bf16  haloed input row tile (zero spatial padding baked in)
       w_ref    : (9*Cin_p, Cout_p)        bf16  tap-major packed conv weight
       out_ref  : (1, th, W, Cout_p)       f32   raw conv output tile
       stats_ref: (1, 1, 2, Cout_p)        f32   row 0 = per-channel sum, row 1 = sum of squares"""
    th, w_dim, cp = out_ref.shape[1], out_ref.shape[2], out_ref.shape[3]
    cin = xt_ref.shape[-1]

    x = xt_ref[0, 0]                                                     # (th+2, W+2, Cin_p)
    # im2col: concatenate the 9 taps along (lane-aligned) channels -> ONE MXU matmul, K = 9*Cin_p.
    taps = [x[dy:dy + th, dx:dx + w_dim, :] for dy in range(3) for dx in range(3)]
    patches = jnp.concatenate(taps, axis=-1).reshape(th * w_dim, 9 * cin)
    acc = jnp.dot(patches, w_ref[...], preferred_element_type=jnp.float32)   # (th*W, Cout_p) f32

    out_ref[0] = acc.reshape(th, w_dim, cp)
    s = jnp.sum(acc, axis=0, keepdims=True)                              # (1, Cout_p)
    ss = jnp.sum(acc * acc, axis=0, keepdims=True)                       # (1, Cout_p)
    stats_ref[0, 0] = jnp.concatenate([s, ss], axis=0)                   # (2, Cout_p)


# --------------------- Kernel B: BatchNorm affine + LeakyReLU (lane-dense) ---------------------
def _bn_act_kernel(y_ref, scale_ref, shift_ref, out_ref):
    z = y_ref[...] * scale_ref[...] + shift_ref[...]          # (1,th,W,Cp) * (1,Cp) broadcasts
    out_ref[...] = jnp.where(z > 0, z, NEG_SLOPE * z).astype(out_ref.dtype)


def _conv_bn_act_layer(x_nhwc, w_packed, gamma_p, beta_p, *, out_dtype):
    """x_nhwc: (N, H, W, Cin_p) bf16; w_packed: (9*Cin_p, Cout_p) bf16; gamma_p/beta_p: (Cout_p,) f32."""
    n, h, w, cin = x_nhwc.shape
    k_dim, cp = w_packed.shape
    th = _pick_row_tile(h)
    n_t = h // th

    # Haloed row tiles (N, n_t, th+2, W+2, Cin_p): small host-side gather that makes the overlapping
    # 3x3 halo expressible with plain BlockSpec tiling (replaces the old monolithic full-image copy).
    xp = jnp.pad(x_nhwc, ((0, 0), (1, 1), (1, 1), (0, 0)))
    tiles = jnp.stack(
        [lax.slice_in_dim(xp, r * th, r * th + th + 2, axis=1) for r in range(n_t)], axis=1)

    conv_raw, stats = pl.pallas_call(
        _conv_stats_kernel,
        out_shape=(jax.ShapeDtypeStruct((n, h, w, cp), jnp.float32),
                   jax.ShapeDtypeStruct((n, n_t, 2, cp), jnp.float32)),
        grid=(n, n_t),
        in_specs=[
            pl.BlockSpec((1, 1, th + 2, w + 2, cin), lambda i, r: (i, r, 0, 0, 0)),
            pl.BlockSpec((k_dim, cp), lambda i, r: (0, 0)),
        ],
        out_specs=(
            pl.BlockSpec((1, th, w, cp), lambda i, r: (i, r, 0, 0)),
            pl.BlockSpec((1, 1, 2, cp), lambda i, r: (i, r, 0, 0)),
        ),
        compiler_params=pltpu.CompilerParams(
            dimension_semantics=("parallel", "parallel")),   # no cross-step state -> both TCs on v7x
    )(tiles, w_packed)

    # Finalize batch statistics (tiny (2, Cp) arrays) and fold BN into a per-channel scale/shift.
    m = float(n * h * w)
    tot = jnp.sum(stats, axis=(0, 1))                        # (2, Cp)
    mean = tot[0] / m
    var = jnp.maximum(tot[1] / m - mean * mean, 0.0)         # biased batch variance (training mode)
    scale = gamma_p * lax.rsqrt(var + BN_EPS)
    shift = beta_p - mean * scale

    return pl.pallas_call(
        _bn_act_kernel,
        out_shape=jax.ShapeDtypeStruct((n, h, w, cp), out_dtype),
        grid=(n, n_t),
        in_specs=[
            pl.BlockSpec((1, th, w, cp), lambda i, r: (i, r, 0, 0)),
            pl.BlockSpec((1, cp), lambda i, r: (0, 0)),
            pl.BlockSpec((1, cp), lambda i, r: (0, 0)),
        ],
        out_specs=pl.BlockSpec((1, th, w, cp), lambda i, r: (i, r, 0, 0)),
        compiler_params=pltpu.CompilerParams(
            dimension_semantics=("parallel", "parallel")),
    )(conv_raw, scale.reshape(1, cp), shift.reshape(1, cp))


# ----------------------------------- parameters & packing -----------------------------------
def _pack_weight(w_oihw, cin_pad, cout_pad):
    cout, cin = w_oihw.shape[0], w_oihw.shape[1]
    w_hwio = jnp.transpose(w_oihw, (2, 3, 1, 0))                         # (3, 3, Cin, Cout)
    w_full = jnp.zeros((3, 3, cin_pad, cout_pad), jnp.float32)
    w_full = w_full.at[:, :, :cin, :cout].set(w_hwio)
    return w_full.reshape(9 * cin_pad, cout_pad).astype(jnp.bfloat16)    # tap-major = im2col order


def _pad_vec(v, pad_to, fill):
    return jnp.full((pad_to,), fill, jnp.float32).at[: v.shape[0]].set(v)


def init_conv_block_params(key, in_channels, out_channels):
    """PyTorch-like init (Conv2d uniform, BN gamma=1/beta=0) + packed, channel-padded TPU layouts."""
    ks = jax.random.split(key, 4)

    def conv_init(kw, kb, cin, cout):
        bound = 1.0 / jnp.sqrt(cin * 9.0)
        w = jax.random.uniform(kw, (cout, cin, 3, 3), jnp.float32, -bound, bound)   # OIHW (torch)
        b = jax.random.uniform(kb, (cout,), jnp.float32, -bound, bound)
        return w, b

    w1, b1 = conv_init(ks[0], ks[1], in_channels, out_channels)
    w2, b2 = conv_init(ks[2], ks[3], out_channels, out_channels)
    torch_params = dict(
        w1=w1, b1=b1, g1=jnp.ones((out_channels,), jnp.float32),
        be1=jnp.zeros((out_channels,), jnp.float32),
        w2=w2, b2=b2, g2=jnp.ones((out_channels,), jnp.float32),
        be2=jnp.zeros((out_channels,), jnp.float32))

    cin_p = _round_up(in_channels, LANE)
    cout_p = _round_up(out_channels, LANE)
    # Conv biases are intentionally not packed: BN's batch-mean subtraction cancels them exactly.
    kernel_params = dict(
        w1=_pack_weight(w1, cin_p, cout_p),
        w2=_pack_weight(w2, cout_p, cout_p),
        g1=_pad_vec(torch_params["g1"], cout_p, 1.0), be1=_pad_vec(torch_params["be1"], cout_p, 0.0),
        g2=_pad_vec(torch_params["g2"], cout_p, 1.0), be2=_pad_vec(torch_params["be2"], cout_p, 0.0))
    return kernel_params, torch_params


@functools.partial(jax.jit, static_argnames=("out_channels",))
def conv_block_forward(x_nchw, kernel_params, *, out_channels):
    """Forward of ConvBlock. Input/output are NCHW (PyTorch convention)."""
    x = jnp.transpose(x_nchw, (0, 2, 3, 1)).astype(jnp.bfloat16)         # NCHW -> NHWC, bf16 operands
    cin = x.shape[-1]
    cin_p = _round_up(cin, LANE)
    if cin_p != cin:
        x = jnp.pad(x, ((0, 0), (0, 0), (0, 0), (0, cin_p - cin)))       # lane-pad input channels
    a1 = _conv_bn_act_layer(x, kernel_params["w1"], kernel_params["g1"], kernel_params["be1"],
                            out_dtype=jnp.bfloat16)                      # bf16 inter-layer intermediate
    a2 = _conv_bn_act_layer(a1, kernel_params["w2"], kernel_params["g2"], kernel_params["be2"],
                            out_dtype=jnp.float32)
    y = a2[..., :out_channels]                                           # drop lane padding
    return jnp.transpose(y, (0, 3, 1, 2))                                # NHWC -> NCHW


# ---------------- pure-JAX reference (mirrors the bf16 operand rounding, f32 math) ----------------
def _ref_layer(x_nhwc, w_oihw, b, gamma, beta):
    xr = x_nhwc.astype(jnp.bfloat16).astype(jnp.float32)
    w = jnp.transpose(w_oihw, (2, 3, 1, 0)).astype(jnp.bfloat16).astype(jnp.float32)   # HWIO
    y = lax.conv_general_dilated(xr, w, (1, 1), ((1, 1), (1, 1)),
                                 dimension_numbers=("NHWC", "HWIO", "NHWC"))
    y = y + b.reshape(1, 1, 1, -1)        # kernel omits this: cancelled by the BN mean subtraction
    mean = jnp.mean(y, axis=(0, 1, 2), keepdims=True)
    var = jnp.mean((y - mean) ** 2, axis=(0, 1, 2), keepdims=True)
    y = (y - mean) * lax.rsqrt(var + BN_EPS)
    y = y * gamma.reshape(1, 1, 1, -1) + beta.reshape(1, 1, 1, -1)
    return jnp.where(y > 0, y, NEG_SLOPE * y)


def _ref_forward(x_nchw, tp):
    x = jnp.transpose(x_nchw, (0, 2, 3, 1)).astype(jnp.float32)
    y = _ref_layer(x, tp["w1"], tp["b1"], tp["g1"], tp["be1"])
    y = _ref_layer(y, tp["w2"], tp["b2"], tp["g2"], tp["be2"])
    return jnp.transpose(y, (0, 3, 1, 2))


if __name__ == "__main__":
    key = jax.random.PRNGKey(0)
    kx, kp = jax.random.split(key)

    batch, in_channels, out_channels, spatial = 2, 4, 8, 16
    x = jax.random.normal(kx, (batch, in_channels, spatial, spatial), jnp.float32)   # NCHW
    kernel_params, torch_params = init_conv_block_params(kp, in_channels, out_channels)

    out = conv_block_forward(x, kernel_params, out_channels=out_channels)
    out = jax.block_until_ready(out)
    assert out.shape == (batch, out_channels, spatial, spatial)

    ref = _ref_forward(x, torch_params)
    err = float(jnp.max(jnp.abs(out - ref)))
    # bf16 matmul operands (mirrored in the reference) + bf16 inter-layer storage -> modest tolerance.
    assert jnp.allclose(out, ref, rtol=1e-2, atol=1e-2), f"mismatch vs JAX reference, max abs err={err}"

    print("KERNEL_OK")
</pallas_src>

<mosaic_0001>
module attributes {stable_mosaic.version = 11 : i64} {
  func.func @_conv_stats_kernel(%arg0: i32, %arg1: i32, %arg2: memref<1x1x10x18x128xbf16, #tpu.memory_space<vmem>>, %arg3: memref<1152x128xbf16, #tpu.memory_space<vmem>>, %arg4: memref<1x8x16x128xf32, #tpu.memory_space<vmem>>, %arg5: memref<1x1x2x128xf32, #tpu.memory_space<vmem>>) attributes {dimension_semantics = [#tpu.dimension_semantics<parallel>, #tpu.dimension_semantics<parallel>], iteration_bounds = array<i64: 2, 2>, scalar_prefetch = 0 : i64, scratch_operands = 0 : i64, tpu.core_type = #tpu.core_type<tc>, window_params = [{transform_indices = @transform_0, window_bounds = array<i64: 1, 1, 10, 18, 128>}, {pipeline_mode = #tpu.pipeline_mode<synchronous>, transform_indices = @transform_1, window_bounds = array<i64: 1152, 128>}, {transform_indices = @transform_2, window_bounds = array<i64: 1, 8, 16, 128>}, {transform_indices = @transform_3, window_bounds = array<i64: 1, 1, 2, 128>}]} {
    %c0 = arith.constant 0 : index
    %c0_0 = arith.constant 0 : index
    %c0_1 = arith.constant 0 : index
    %c0_2 = arith.constant 0 : index
    %c0_3 = arith.constant 0 : index
    %0 = vector.load %arg2[%c0, %c0_0, %c0_1, %c0_2, %c0_3] : memref<1x1x10x18x128xbf16, #tpu.memory_space<vmem>>, vector<1x1x10x18x128xbf16>
    %1 = vector.shape_cast %0 : vector<1x1x10x18x128xbf16> to vector<10x18x128xbf16>
    %2 = vector.extract_strided_slice %1 {offsets = [0, 0, 0], sizes = [8, 16, 128], strides = [1, 1, 1]} : vector<10x18x128xbf16> to vector<8x16x128xbf16>
    %3 = vector.extract_strided_slice %1 {offsets = [0, 1, 0], sizes = [8, 16, 128], strides = [1, 1, 1]} : vector<10x18x128xbf16> to vector<8x16x128xbf16>
    %4 = vector.extract_strided_slice %1 {offsets = [0, 2, 0], sizes = [8, 16, 128], strides = [1, 1, 1]} : vector<10x18x128xbf16> to vector<8x16x128xbf16>
    %5 = vector.extract_strided_slice %1 {offsets = [1, 0, 0], sizes = [8, 16, 128], strides = [1, 1, 1]} : vector<10x18x128xbf16> to vector<8x16x128xbf16>
    %6 = vector.extract_strided_slice %1 {offsets = [1, 1, 0], sizes = [8, 16, 128], strides = [1, 1, 1]} : vector<10x18x128xbf16> to vector<8x16x128xbf16>
    %7 = vector.extract_strided_slice %1 {offsets = [1, 2, 0], sizes = [8, 16, 128], strides = [1, 1, 1]} : vector<10x18x128xbf16> to vector<8x16x128xbf16>
    %8 = vector.extract_strided_slice %1 {offsets = [2, 0, 0], sizes = [8, 16, 128], strides = [1, 1, 1]} : vector<10x18x128xbf16> to vector<8x16x128xbf16>
    %9 = vector.extract_strided_slice %1 {offsets = [2, 1, 0], sizes = [8, 16, 128], strides = [1, 1, 1]} : vector<10x18x128xbf16> to vector<8x16x128xbf16>
    %10 = vector.extract_strided_slice %1 {offsets = [2, 2, 0], sizes = [8, 16, 128], strides = [1, 1, 1]} : vector<10x18x128xbf16> to vector<8x16x128xbf16>
    %11 = tpu.concatenate %2, %3, %4, %5, %6, %7, %8, %9, %10 in 2 : vector<8x16x128xbf16>, vector<8x16x128xbf16>, vector<8x16x128xbf16>, vector<8x16x128xbf16>, vector<8x16x128xbf16>, vector<8x16x128xbf16>, vector<8x16x128xbf16>, vector<8x16x128xbf16>, vector<8x16x128xbf16> -> vector<8x16x1152xbf16>
    %12 = vector.shape_cast %11 : vector<8x16x1152xbf16> to vector<128x1152xbf16>
    %c0_4 = arith.constant 0 : index
    %c0_5 = arith.constant 0 : index
    %13 = vector.load %arg3[%c0_4, %c0_5] : memref<1152x128xbf16, #tpu.memory_space<vmem>>, vector<1152x128xbf16>
    %cst = arith.constant dense<0.000000e+00> : vector<128x128xf32>
    %14 = tpu.matmul %12, %13, %cst {dimension_numbers = #tpu.dot_dimension_numbers<[1], [0], [0], [1], [0, 0, 1, 1], [], []>} : vector<128x1152xbf16>, vector<1152x128xbf16>, vector<128x128xf32> -> vector<128x128xf32>
    %15 = vector.shape_cast %14 : vector<128x128xf32> to vector<8x16x128xf32>
    %c0_6 = arith.constant 0 : index
    %c0_7 = arith.constant 0 : index
    %c0_8 = arith.constant 0 : index
    %c0_9 = arith.constant 0 : index
    %16 = vector.load %arg4[%c0_6, %c0_7, %c0_8, %c0_9] : memref<1x8x16x128xf32, #tpu.memory_space<vmem>>, vector<1x8x16x128xf32>
    %17 = vector.shape_cast %16 : vector<1x8x16x128xf32> to vector<8x16x128xf32>
    %18 = vector.shape_cast %15 : vector<8x16x128xf32> to vector<1x8x16x128xf32>
    tpu.vector_store %arg4[%c0_6, %c0_7, %c0_8, %c0_9], %18 {strides = array<i32>} : memref<1x8x16x128xf32, #tpu.memory_space<vmem>>, vector<1x8x16x128xf32>,
    %cst_10 = arith.constant dense<0.000000e+00> : vector<128xf32>
    %19 = vector.multi_reduction <add>, %14, %cst_10 [0] : vector<128x128xf32> to vector<128xf32>
    %20 = vector.shape_cast %19 : vector<128xf32> to vector<1x128xf32>
    %21 = arith.mulf %14, %14 : vector<128x128xf32>
    %cst_11 = arith.constant dense<0.000000e+00> : vector<128xf32>
    %22 = vector.multi_reduction <add>, %21, %cst_11 [0] : vector<128x128xf32> to vector<128xf32>
    %23 = vector.shape_cast %22 : vector<128xf32> to vector<1x128xf32>
    %24 = tpu.concatenate %20, %23 in 0 : vector<1x128xf32>, vector<1x128xf32> -> vector<2x128xf32>
    %c0_12 = arith.constant 0 : index
    %c0_13 = arith.constant 0 : index
    %c0_14 = arith.constant 0 : index
    %c0_15 = arith.constant 0 : index
    %25 = vector.load %arg5[%c0_12, %c0_13, %c0_14, %c0_15] : memref<1x1x2x128xf32, #tpu.memory_space<vmem>>, vector<1x1x2x128xf32>
    %26 = vector.shape_cast %25 : vector<1x1x2x128xf32> to vector<2x128xf32>
    %27 = vector.shape_cast %24 : vector<2x128xf32> to vector<1x1x2x128xf32>
    tpu.vector_store %arg5[%c0_12, %c0_13, %c0_14, %c0_15], %27 {strides = array<i32>} : memref<1x1x2x128xf32, #tpu.memory_space<vmem>>, vector<1x1x2x128xf32>,
    return
  }
  func.func @transform_0(%arg0: i32, %arg1: i32) -> (i32, i32, i32, i32, i32) {
    %c0_i32 = arith.constant 0 : i32
    %c0_i32_0 = arith.constant 0 : i32
    %c0_i32_1 = arith.constant 0 : i32
    %c0_i32_2 = arith.constant 0 : i32
    return %arg0, %arg1, %c0_i32, %c0_i32_0, %c0_i32_1 : i32, i32, i32, i32, i32
  }
  func.func @transform_1(%arg0: i32, %arg1: i32) -> (i32, i32) {
    %c0_i32 = arith.constant 0 : i32
    %c0_i32_0 = arith.constant 0 : i32
    %c0_i32_1 = arith.constant 0 : i32
    return %c0_i32, %c0_i32_0 : i32, i32
  }
  func.func @transform_2(%arg0: i32, %arg1: i32) -> (i32, i32, i32, i32) {
    %c0_i32 = arith.constant 0 : i32
    %c0_i32_0 = arith.constant 0 : i32
    %c0_i32_1 = arith.constant 0 : i32
    return %arg0, %arg1, %c0_i32, %c0_i32_0 : i32, i32, i32, i32
  }
  func.func @transform_3(%arg0: i32, %arg1: i32) -> (i32, i32, i32, i32) {
    %c0_i32 = arith.constant 0 : i32
    %c0_i32_0 = arith.constant 0 : i32
    %c0_i32_1 = arith.constant 0 : i32
    return %arg0, %arg1, %c0_i32, %c0_i32_0 : i32, i32, i32, i32
  }
}

module attributes {stable_mosaic.version = 11 : i64} {
  func.func @_bn_act_kernel(%arg0: i32, %arg1: i32, %arg2: memref<1x8x16x128xf32, #tpu.memory_space<vmem>>, %arg3: memref<1x128xf32, #tpu.memory_space<vmem>>, %arg4: memref<1x128xf32, #tpu.memory_space<vmem>>, %arg5: memref<1x8x16x128xbf16, #tpu.memory_space<vmem>>) attributes {dimension_semantics = [#tpu.dimension_semantics<parallel>, #tpu.dimension_semantics<parallel>], iteration_bounds = array<i64: 2, 2>, scalar_prefetch = 0 : i64, scratch_operands = 0 : i64, tpu.core_type = #tpu.core_type<tc>, window_params = [{transform_indices = @transform_0, window_bounds = array<i64: 1, 8, 16, 128>}, {pipeline_mode = #tpu.pipeline_mode<synchronous>, transform_indices = @transform_1, window_bounds = array<i64: 1, 128>}, {pipeline_mode = #tpu.pipeline_mode<synchronous>, transform_indices = @transform_2, window_bounds = array<i64: 1, 128>}, {transform_indices = @transform_3, window_bounds = array<i64: 1, 8, 16, 128>}]} {
    %c0 = arith.constant 0 : index
    %c0_0 = arith.constant 0 : index
    %c0_1 = arith.constant 0 : index
    %c0_2 = arith.constant 0 : index
    %0 = vector.load %arg2[%c0, %c0_0, %c0_1, %c0_2] : memref<1x8x16x128xf32, #tpu.memory_space<vmem>>, vector<1x8x16x128xf32>
    %c0_3 = arith.constant 0 : index
    %c0_4 = arith.constant 0 : index
    %1 = vector.load %arg3[%c0_3, %c0_4] : memref<1x128xf32, #tpu.memory_space<vmem>>, vector<1x128xf32>
    %2 = vector.shape_cast %1 : vector<1x128xf32> to vector<1x1x1x128xf32>
    %3 = vector.broadcast %2 : vector<1x1x1x128xf32> to vector<1x8x16x128xf32>
    %4 = arith.mulf %0, %3 : vector<1x8x16x128xf32>
    %c0_5 = arith.constant 0 : index
    %c0_6 = arith.constant 0 : index
    %5 = vector.load %arg4[%c0_5, %c0_6] : memref<1x128xf32, #tpu.memory_space<vmem>>, vector<1x128xf32>
    %6 = vector.shape_cast %5 : vector<1x128xf32> to vector<1x1x1x128xf32>
    %7 = vector.broadcast %6 : vector<1x1x1x128xf32> to vector<1x8x16x128xf32>
    %8 = arith.addf %4, %7 : vector<1x8x16x128xf32>
    %cst = arith.constant 0.000000e+00 : f32
    %9 = vector.broadcast %cst : f32 to vector<1x8x16x128xf32>
    %10 = arith.cmpf ogt, %8, %9 : vector<1x8x16x128xf32>
    %cst_7 = arith.constant 0.00999999977 : f32
    %11 = vector.broadcast %cst_7 : f32 to vector<1x8x16x128xf32>
    %12 = arith.mulf %11, %8 : vector<1x8x16x128xf32>
    %13 = arith.select %10, %8, %12 : vector<1x8x16x128xi1>, vector<1x8x16x128xf32>
    %14 = arith.truncf %13 : vector<1x8x16x128xf32> to vector<1x8x16x128xbf16>
    %c0_8 = arith.constant 0 : index
    %c0_9 = arith.constant 0 : index
    %c0_10 = arith.constant 0 : index
    %c0_11 = arith.constant 0 : index
    %15 = vector.load %arg5[%c0_8, %c0_9, %c0_10, %c0_11] : memref<1x8x16x128xbf16, #tpu.memory_space<vmem>>, vector<1x8x16x128xbf16>
    tpu.vector_store %arg5[%c0_8, %c0_9, %c0_10, %c0_11], %14 {strides = array<i32>} : memref<1x8x16x128xbf16, #tpu.memory_space<vmem>>, vector<1x8x16x128xbf16>,
    return
  }
  func.func @transform_0(%arg0: i32, %arg1: i32) -> (i32, i32, i32, i32) {
    %c0_i32 = arith.constant 0 : i32
    %c0_i32_0 = arith.constant 0 : i32
    %c0_i32_1 = arith.constant 0 : i32
    return %arg0, %arg1, %c0_i32, %c0_i32_0 : i32, i32, i32, i32
  }
  func.func @transform_1(%arg0: i32, %arg1: i32) -> (i32, i32) {
    %c0_i32 = arith.constant 0 : i32
    %c0_i32_0 = arith.constant 0 : i32
    %c0_i32_1 = arith.constant 0 : i32
    return %c0_i32, %c0_i32_0 : i32, i32
  }
  func.func @transform_2(%arg0: i32, %arg1: i32) -> (i32, i32) {
    %c0_i32 = arith.constant 0 : i32
    %c0_i32_0 = arith.constant 0 : i32
    %c0_i32_1 = arith.constant 0 : i32
    return %c0_i32, %c0_i32_0 : i32, i32
  }
  func.func @transform_3(%arg0: i32, %arg1: i32) -> (i32, i32, i32, i32) {
    %c0_i32 = arith.constant 0 : i32
    %c0_i32_0 = arith.constant 0 : i32
    %c0_i32_1 = arith.constant 0 : i32
    return %arg0, %arg1, %c0_i32, %c0_i32_0 : i32, i32, i32, i32
  }
}

module attributes {stable_mosaic.version = 11 : i64} {
  func.func @_bn_act_kernel(%arg0: i32, %arg1: i32, %arg2: memref<1x8x16x128xf32, #tpu.memory_space<vmem>>, %arg3: memref<1x128xf32, #tpu.memory_space<vmem>>, %arg4: memref<1x128xf32, #tpu.memory_space<vmem>>, %arg5: memref<1x8x16x128xf32, #tpu.memory_space<vmem>>) attributes {dimension_semantics = [#tpu.dimension_semantics<parallel>, #tpu.dimension_semantics<parallel>], iteration_bounds = array<i64: 2, 2>, scalar_prefetch = 0 : i64, scratch_operands = 0 : i64, tpu.core_type = #tpu.core_type<tc>, window_params = [{transform_indices = @transform_0, window_bounds = array<i64: 1, 8, 16, 128>}, {pipeline_mode = #tpu.pipeline_mode<synchronous>, transform_indices = @transform_1, window_bounds = array<i64: 1, 128>}, {pipeline_mode = #tpu.pipeline_mode<synchronous>, transform_indices = @transform_2, window_bounds = array<i64: 1, 128>}, {transform_indices = @transform_3, window_bounds = array<i64: 1, 8, 16, 128>}]} {
    %c0 = arith.constant 0 : index
    %c0_0 = arith.constant 0 : index
    %c0_1 = arith.constant 0 : index
    %c0_2 = arith.constant 0 : index
    %0 = vector.load %arg2[%c0, %c0_0, %c0_1, %c0_2] : memref<1x8x16x128xf32, #tpu.memory_space<vmem>>, vector<1x8x16x128xf32>
    %c0_3 = arith.constant 0 : index
    %c0_4 = arith.constant 0 : index
    %1 = vector.load %arg3[%c0_3, %c0_4] : memref<1x128xf32, #tpu.memory_space<vmem>>, vector<1x128xf32>
    %2 = vector.shape_cast %1 : vector<1x128xf32> to vector<1x1x1x128xf32>
    %3 = vector.broadcast %2 : vector<1x1x1x128xf32> to vector<1x8x16x128xf32>
    %4 = arith.mulf %0, %3 : vector<1x8x16x128xf32>
    %c0_5 = arith.constant 0 : index
    %c0_6 = arith.constant 0 : index
    %5 = vector.load %arg4[%c0_5, %c0_6] : memref<1x128xf32, #tpu.memory_space<vmem>>, vector<1x128xf32>
    %6 = vector.shape_cast %5 : vector<1x128xf32> to vector<1x1x1x128xf32>
    %7 = vector.broadcast %6 : vector<1x1x1x128xf32> to vector<1x8x16x128xf32>
    %8 = arith.addf %4, %7 : vector<1x8x16x128xf32>
    %cst = arith.constant 0.000000e+00 : f32
    %9 = vector.broadcast %cst : f32 to vector<1x8x16x128xf32>
    %10 = arith.cmpf ogt, %8, %9 : vector<1x8x16x128xf32>
    %cst_7 = arith.constant 0.00999999977 : f32
    %11 = vector.broadcast %cst_7 : f32 to vector<1x8x16x128xf32>
    %12 = arith.mulf %11, %8 : vector<1x8x16x128xf32>
    %13 = arith.select %10, %8, %12 : vector<1x8x16x128xi1>, vector<1x8x16x128xf32>
    %c0_8 = arith.constant 0 : index
    %c0_9 = arith.constant 0 : index
    %c0_10 = arith.constant 0 : index
    %c0_11 = arith.constant 0 : index
    %14 = vector.load %arg5[%c0_8, %c0_9, %c0_10, %c0_11] : memref<1x8x16x128xf32, #tpu.memory_space<vmem>>, vector<1x8x16x128xf32>
    tpu.vector_store %arg5[%c0_8, %c0_9, %c0_10, %c0_11], %13 {strides = array<i32>} : memref<1x8x16x128xf32, #tpu.memory_space<vmem>>, vector<1x8x16x128xf32>,
    return
  }
  func.func @transform_0(%arg0: i32, %arg1: i32) -> (i32, i32, i32, i32) {
    %c0_i32 = arith.constant 0 : i32
    %c0_i32_0 = arith.constant 0 : i32
    %c0_i32_1 = arith.constant 0 : i32
    return %arg0, %arg1, %c0_i32, %c0_i32_0 : i32, i32, i32, i32
  }
  func.func @transform_1(%arg0: i32, %arg1: i32) -> (i32, i32) {
    %c0_i32 = arith.constant 0 : i32
    %c0_i32_0 = arith.constant 0 : i32
    %c0_i32_1 = arith.constant 0 : i32
    return %c0_i32, %c0_i32_0 : i32, i32
  }
  func.func @transform_2(%arg0: i32, %arg1: i32) -> (i32, i32) {
    %c0_i32 = arith.constant 0 : i32
    %c0_i32_0 = arith.constant 0 : i32
    %c0_i32_1 = arith.constant 0 : i32
    return %c0_i32, %c0_i32_0 : i32, i32
  }
  func.func @transform_3(%arg0: i32, %arg1: i32) -> (i32, i32, i32, i32) {
    %c0_i32 = arith.constant 0 : i32
    %c0_i32_0 = arith.constant 0 : i32
    %c0_i32_1 = arith.constant 0 : i32
    return %arg0, %arg1, %c0_i32, %c0_i32_0 : i32, i32, i32, i32
  }
}

</mosaic_0001>

<llo_original>
// kernel: conv_block_forward.5
$region0: #{conv_block_forward.5}
  #allocation0 [shape = 'u32[]', space=smem, size = 0x4, offset = 0x4, fixed_abs, tag = 'smem constant byte address 0x4 - core index']
  #allocation1 [shape = 'u32[144,128]{1,0:T(1,128)}', space=vmem, size = 0x12000, scoped, tag = 'internal scratch']
  %s0 = inlined_call_operand.vmem [shape: f32[2,16,16,128], index: 0, kind: input, shape index: {}]
  %s1 = inlined_call_operand.vmem [shape: f32[1,128], index: 1, kind: input, shape index: {}]
  %s2 = inlined_call_operand.vmem [shape: f32[1,128], index: 2, kind: input, shape index: {}]
  %s3 = inlined_call_operand.vmem [shape: bf16[2,16,16,128], index: 3, kind: output, shape index: {}]
  %s4 = sld [smem:[#allocation0]]
  $region45: #{conv_block_forward.5} parent=0
    _
  %s6 = ssub.s32 1, %s4
  %s7 = scalar_select 0, %s6, %s4
  loop: start=0, step=1, limit=6
  $region2: #{conv_block_forward.5} parent=0 // loop_pre_header
    _
  $region3: #{conv_block_forward.5} parent=0 // loop_header
    %s9 = sphi 0, %s13
    %p10 = scmp.ge.s32.totalorder %s9, 6
    %s16 = sphi 0, %s28
    %s17 = sphi 0, %s24
    %s18 = sphi 0, %s16
    %s19 = sphi 0, %s17
    %s20 = sphi 0, %s18
    %s21 = sphi 0, %s19
    %s33 = sphi 0, %s35
    %s36 = sphi 0, %s33
    %s37 = sphi 0, %s36
    %s53 = sphi 0, %s37
    %s57 = sphi 0, %s57
    %s59 = sphi 0, %s57
    %s60 = sphi 0, %s59
    %s74 = sphi 0, %s60
    %s78 = sphi 0, %s78
    %s80 = sphi 0, %s78
    %s81 = sphi 0, %s80
    %s95 = sphi 0, %s81
    %s103 = sphi 0, %s105
    %s106 = sphi 0, %s103
    %s107 = sphi 0, %s106
    %s123 = sphi 0, %s107
  $region4: #{conv_block_forward.5} parent=0 // loop_header_branch
    %12 = sbr.rel (%p10) target = $region8
  $region5: #{conv_block_forward.5} parent=0 // loop_body
    %s14 = ssub.s32 %s9, 1
    %s15 = ssub.s32 %s9, 2
    %s22 = sadd.s32 1, %s17
    %p23 = scmp.ge.s32.totalorder %s22, 2
    %s24 = scalar_select %p23, 0, %s22
    %s25 = sadd.s32 1, %s16
    %s26 = scalar_select %p23, %s25, %s16
    %p27 = scmp.ge.s32.totalorder %s26, 2
    %s28 = scalar_select %p27, 0, %s26
    %s29 = ssub.s32 %s16, %s28
    %s30 = ssub.s32 %s17, %s24
    %s31 = sor.u32 %s29, %s30
    %p32 = scmp.eq.s32.totalorder %s31, 0
    %s34 = sadd.s32 %s33, 1
    %s35 = scalar_select %p32, %s33, %s34
    %p38 = pneg %p32
    %p39 = scmp.eq.s32.totalorder %s9, 3
    %p40 = por %p38, %p39
    %p41 = scmp.ne.s32.totalorder %s33, %s36
    %p42 = scmp.eq.s32.totalorder %s9, 0
    %p43 = por %p41, %p42
    %p44 = scmp.ne.s32.totalorder %s33, %s36
    %p45 = scmp.eq.s32.totalorder %s14, 3
    %p46 = por %p44, %p45
    %p47 = scmp.ne.s32.totalorder %s36, %s37
    %p48 = scmp.eq.s32.totalorder %s14, 0
    %p49 = por %p47, %p48
    %p50 = scmp.ne.s32.totalorder %s36, %s37
    %p51 = scmp.eq.s32.totalorder %s15, 3
    %p52 = por %p50, %p51
    %p54 = scmp.ne.s32.totalorder %s37, %s53
    %p55 = scmp.eq.s32.totalorder %s15, 0
    %p56 = por %p54, %p55
    %s58 = sadd.s32 %s57, 1
    %p61 = scmp.eq.s32.totalorder %s9, 3
    %p62 = scmp.ne.s32.totalorder %s57, %s59
    %p63 = scmp.eq.s32.totalorder %s9, 0
    %p64 = por %p62, %p63
    %p65 = scmp.ne.s32.totalorder %s57, %s59
    %p66 = scmp.eq.s32.totalorder %s14, 3
    %p67 = por %p65, %p66
    %p68 = scmp.ne.s32.totalorder %s59, %s60
    %p69 = scmp.eq.s32.totalorder %s14, 0
    %p70 = por %p68, %p69
    %p71 = scmp.ne.s32.totalorder %s59, %s60
    %p72 = scmp.eq.s32.totalorder %s15, 3
    %p73 = por %p71, %p72
    %p75 = scmp.ne.s32.totalorder %s60, %s74
    %p76 = scmp.eq.s32.totalorder %s15, 0
    %p77 = por %p75, %p76
    %s79 = sadd.s32 %s78, 1
    %p82 = scmp.eq.s32.totalorder %s9, 3
    %p83 = scmp.ne.s32.totalorder %s78, %s80
    %p84 = scmp.eq.s32.totalorder %s9, 0
    %p85 = por %p83, %p84
    %p86 = scmp.ne.s32.totalorder %s78, %s80
    %p87 = scmp.eq.s32.totalorder %s14, 3
    %p88 = por %p86, %p87
    %p89 = scmp.ne.s32.totalorder %s80, %s81
    %p90 = scmp.eq.s32.totalorder %s14, 0
    %p91 = por %p89, %p90
    %p92 = scmp.ne.s32.totalorder %s80, %s81
    %p93 = scmp.eq.s32.totalorder %s15, 3
    %p94 = por %p92, %p93
    %p96 = scmp.ne.s32.totalorder %s81, %s95
    %p97 = scmp.eq.s32.totalorder %s15, 0
    %p98 = por %p96, %p97
    %s99 = ssub.s32 %s16, %s28
    %s100 = ssub.s32 %s17, %s24
    %s101 = sor.u32 %s99, %s100
    %p102 = scmp.eq.s32.totalorder %s101, 0
    %s104 = sadd.s32 %s103, 1
    %s105 = scalar_select %p102, %s103, %s104
    %p108 = pneg %p102
    %p109 = scmp.eq.s32.totalorder %s9, 3
    %p110 = por %p108, %p109
    %p111 = scmp.ne.s32.totalorder %s103, %s106
    %p112 = scmp.eq.s32.totalorder %s9, 0
    %p113 = por %p111, %p112
    %p114 = scmp.ne.s32.totalorder %s103, %s106
    %p115 = scmp.eq.s32.totalorder %s14, 3
    %p116 = por %p114, %p115
    %p117 = scmp.ne.s32.totalorder %s106, %s107
    %p118 = scmp.eq.s32.totalorder %s14, 0
    %p119 = por %p117, %p118
    %p120 = scmp.ne.s32.totalorder %s106, %s107
    %p121 = scmp.eq.s32.totalorder %s15, 3
    %p122 = por %p120, %p121
    %p124 = scmp.ne.s32.totalorder %s107, %s123
    %p125 = scmp.eq.s32.totalorder %s15, 0
    %p126 = por %p124, %p125
    %p127 = scmp.le.s32.totalorder 1, %s9
    %p128 = scmp.lt.s32.totalorder %s9, 5
    %p129 = pnand %p127, %p128
    %p130 = pneg %p129
    // Predicated region
    $region9: #{conv_block_forward.5} parent=5 // pred_check
      _
    $region10: #{conv_block_forward.5} parent=5 // pred_check_branch
      %132 = sbr.rel (%p129) target = $region12
    $region11: #{conv_block_forward.5} parent=5 // pred_region
      %s133 = ssub.s32 %s9, 1
      // Predicated region
      $region13: #{conv_block_forward.5} parent=11 // pred_check
        %p134 = pneg %p70
      $region14: #{conv_block_forward.5} parent=11 // pred_check_branch
        %136 = sbr.rel (%p134) target = $region16
      $region15: #{conv_block_forward.5} parent=11 // pred_region
        _
      $region16: #{conv_block_forward.5} parent=11 // pred_fallthru
        _
      // Predicated region
      $region17: #{conv_block_forward.5} parent=11 // pred_check
        %p137 = pneg %p91
      $region18: #{conv_block_forward.5} parent=11 // pred_check_branch
        %139 = sbr.rel (%p137) target = $region20
      $region19: #{conv_block_forward.5} parent=11 // pred_region
        _
      $region20: #{conv_block_forward.5} parent=11 // pred_fallthru
        _
    $region12: #{conv_block_forward.5} parent=5 // pred_fallthru
      _
    %p140 = scmp.lt.s32.totalorder %s9, 4
    // Predicated region
    $region21: #{conv_block_forward.5} parent=5 // pred_check
      %p141 = pneg %p140
    $region22: #{conv_block_forward.5} parent=5 // pred_check_branch
      %143 = sbr.rel (%p141) target = $region24
    $region23: #{conv_block_forward.5} parent=5 // pred_region
      // Predicated region
      $region25: #{conv_block_forward.5} parent=23 // pred_check
        %p144 = pneg %p43
      $region26: #{conv_block_forward.5} parent=23 // pred_check_branch
        %146 = sbr.rel (%p144) target = $region28
      $region27: #{conv_block_forward.5} parent=23 // pred_region
        %s147 = smul.u32 8, %s17
        %p148 = scmp.lt.s32.totalorder %s16, 1
        %s149 = scalar_select %p148, %s16, 1
        %p150 = scmp.lt.s32.totalorder %s147, 15
        %s151 = scalar_select %p150, %s147, 15
        %s152 = smul.addr %s151, 2
        %s153 = smul.addr %s149, 32
        %s154 = sadd.s32 %s152, %s153
        %s155 = smul.addr %s154, 8
        %s156 = scalar_lea.vmem %s0, %s155
        %s157 = smul.u32 8, %s17
      $region28: #{conv_block_forward.5} parent=23 // pred_fallthru
        _
    $region24: #{conv_block_forward.5} parent=5 // pred_fallthru
      _
    %p158 = scmp.le.s32.totalorder 1, %s9
    %p159 = scmp.lt.s32.totalorder %s9, 5
    %p160 = pnand %p158, %p159
    %p161 = pneg %p160
    // Predicated region
    $region29: #{conv_block_forward.5} parent=5 // pred_check
      _
    $region30: #{conv_block_forward.5} parent=5 // pred_check_branch
      %163 = sbr.rel (%p160) target = $region32
    $region31: #{conv_block_forward.5} parent=5 // pred_region
      %s164 = ssub.s32 %s9, 1
      %s165 = smul.u32 8, %s19
      %p166 = scmp.lt.s32.totalorder %s18, 1
      %s167 = scalar_select %p166, %s18, 1
      %p168 = scmp.lt.s32.totalorder %s165, 15
      %s169 = scalar_select %p168, %s165, 15
      %s170 = smul.addr %s169, 2
      %s171 = smul.addr %s167, 32
      %s172 = sadd.s32 %s170, %s171
      %s173 = smul.addr %s172, 8
      %s174 = scalar_lea.vmem %s0, %s173
      %p175 = pneg %p49
      %p176 = pneg %p46
      %p177 = pneg %p70
      %p178 = pneg %p67
      %p179 = pneg %p91
      %p180 = pneg %p88
      %p181 = pneg %p119
      %p182 = pneg %p116
      %s183 = smul.u32 8, %s19
      %p184 = scmp.lt.s32.totalorder %s18, 1
      %s185 = scalar_select %p184, %s18, 1
      %p186 = scmp.lt.s32.totalorder %s183, 15
      %s187 = scalar_select %p186, %s183, 15
      %s188 = smul.addr %s187, 2
      %s189 = smul.addr %s185, 32
      %s190 = sadd.s32 %s188, %s189
      %s191 = smul.addr %s190, 4
      %s192 = scalar_lea.vmem %s3, %s191
      %s193 = smul.u32 8, %s19
      %p194 = scmp.lt.s32.totalorder %s18, 1
      %s195 = scalar_select %p194, %s18, 1
      %p196 = scmp.lt.s32.totalorder %s193, 15
      %s197 = scalar_select %p196, %s193, 15
      %s198 = smul.addr %s197, 2
      %s199 = smul.addr %s195, 32
      %s200 = sadd.s32 %s198, %s199
      %s201 = smul.addr %s200, 8
      %s202 = scalar_lea.vmem %s0, %s201
      %s203 = smul.u32 8, %s19
      %s204 = smul.u32 8, %s19
      %p205 = scmp.lt.s32.totalorder %s18, 1
      %s206 = scalar_select %p205, %s18, 1
      %p207 = scmp.lt.s32.totalorder %s204, 15
      %s208 = scalar_select %p207, %s204, 15
      %s209 = smul.addr %s208, 2
      %s210 = smul.addr %s206, 32
      %s211 = sadd.s32 %s209, %s210
      %s212 = smul.addr %s211, 4
      %s213 = scalar_lea.vmem %s3, %s212
      %s214 = smul.u32 8, %s19
      %v215 = vld [vmem:[%s202] sm:$0xff]
      %v216 = vld [vmem:[%s202 + $0x8] sm:$0xff]
      %v217 = vld [vmem:[%s202 + $0x10] sm:$0xff]
      %v218 = vld [vmem:[%s202 + $0x18] sm:$0xff]
      %v219 = vld [vmem:[%s202 + $0x20] sm:$0xff]
      %v220 = vld [vmem:[%s202 + $0x28] sm:$0xff]
      %v221 = vld [vmem:[%s202 + $0x30] sm:$0xff]
      %v222 = vld [vmem:[%s202 + $0x38] sm:$0xff]
      %v223 = vld [vmem:[%s202 + $0x40] sm:$0xff]
      %v224 = vld [vmem:[%s202 + $0x48] sm:$0xff]
      %v225 = vld [vmem:[%s202 + $0x50] sm:$0xff]
      %v226 = vld [vmem:[%s202 + $0x58] sm:$0xff]
      %v227 = vld [vmem:[%s202 + $0x60] sm:$0xff]
      %v228 = vld [vmem:[%s202 + $0x68] sm:$0xff]
      %v229 = vld [vmem:[%s202 + $0x70] sm:$0xff]
      %v230 = vld [vmem:[%s202 + $0x78] sm:$0xff]
      %v231 = vld [vmem:[%s1] sm:$0x1]
      %v233 = vlaneseq
      %v234 = vshrl.u32 %v233, 7
      %v235 = vsub.s32 0, %v234
      %v236 = vrot.slane %v231, %v235
      %v238 = vmul.f32 %v215, %v236
      %v239 = vmul.f32 %v216, %v236
      %v240 = vmul.f32 %v217, %v236
      %v241 = vmul.f32 %v218, %v236
      %v242 = vmul.f32 %v219, %v236
      %v243 = vmul.f32 %v220, %v236
      %v244 = vmul.f32 %v221, %v236
      %v245 = vmul.f32 %v222, %v236
      %v246 = vmul.f32 %v223, %v236
      %v247 = vmul.f32 %v224, %v236
      %v248 = vmul.f32 %v225, %v236
      %v249 = vmul.f32 %v226, %v236
      %v250 = vmul.f32 %v227, %v236
      %v251 = vmul.f32 %v228, %v236
      %v252 = vmul.f32 %v229, %v236
      %v253 = vmul.f32 %v230, %v236
      %v254 = vld [vmem:[%s2] sm:$0x1]
      %v256 = vlaneseq
      %v257 = vshrl.u32 %v256, 7
      %v258 = vsub.s32 0, %v257
      %v259 = vrot.slane %v254, %v258
      %v261 = vadd.f32 %v238, %v259
      %v262 = vadd.f32 %v239, %v259
      %v263 = vadd.f32 %v240, %v259
      %v264 = vadd.f32 %v241, %v259
      %v265 = vadd.f32 %v242, %v259
      %v266 = vadd.f32 %v243, %v259
      %v267 = vadd.f32 %v244, %v259
      %v268 = vadd.f32 %v245, %v259
      %v269 = vadd.f32 %v246, %v259
      %v270 = vadd.f32 %v247, %v259
      %v271 = vadd.f32 %v248, %v259
      %v272 = vadd.f32 %v249, %v259
      %v273 = vadd.f32 %v250, %v259
      %v274 = vadd.f32 %v251, %v259
      %v275 = vadd.f32 %v252, %v259
      %v276 = vadd.f32 %v253, %v259
      %vm277 = vcmp.gt.f32.partialorder %v261, 0.0
      %vm278 = vcmp.gt.f32.partialorder %v262, 0.0
      %vm279 = vcmp.gt.f32.partialorder %v263, 0.0
      %vm280 = vcmp.gt.f32.partialorder %v264, 0.0
      %vm281 = vcmp.gt.f32.partialorder %v265, 0.0
      %vm282 = vcmp.gt.f32.partialorder %v266, 0.0
      %vm283 = vcmp.gt.f32.partialorder %v267, 0.0
      %vm284 = vcmp.gt.f32.partialorder %v268, 0.0
      %vm285 = vcmp.gt.f32.partialorder %v269, 0.0
      %vm286 = vcmp.gt.f32.partialorder %v270, 0.0
      %vm287 = vcmp.gt.f32.partialorder %v271, 0.0
      %vm288 = vcmp.gt.f32.partialorder %v272, 0.0
      %vm289 = vcmp.gt.f32.partialorder %v273, 0.0
      %vm290 = vcmp.gt.f32.partialorder %v274, 0.0
      %vm291 = vcmp.gt.f32.partialorder %v275, 0.0
      %vm292 = vcmp.gt.f32.partialorder %v276, 0.0
      %v293 = vmul.f32 %v261, 0.01
      %v294 = vmul.f32 %v262, 0.01
      %v295 = vmul.f32 %v263, 0.01
      %v296 = vmul.f32 %v264, 0.01
      %v297 = vmul.f32 %v265, 0.01
      %v298 = vmul.f32 %v266, 0.01
      %v299 = vmul.f32 %v267, 0.01
      %v300 = vmul.f32 %v268, 0.01
      %v301 = vmul.f32 %v269, 0.01
      %v302 = vmul.f32 %v270, 0.01
      %v303 = vmul.f32 %v271, 0.01
      %v304 = vmul.f32 %v272, 0.01
      %v305 = vmul.f32 %v273, 0.01
      %v306 = vmul.f32 %v274, 0.01
      %v307 = vmul.f32 %v275, 0.01
      %v308 = vmul.f32 %v276, 0.01
      %v309 = vsel %vm277, %v261, %v293
      %v310 = vsel %vm278, %v262, %v294
      %v311 = vsel %vm279, %v263, %v295
      %v312 = vsel %vm280, %v264, %v296
      %v313 = vsel %vm281, %v265, %v297
      %v314 = vsel %vm282, %v266, %v298
      %v315 = vsel %vm283, %v267, %v299
      %v316 = vsel %vm284, %v268, %v300
      %v317 = vsel %vm285, %v269, %v301
      %v318 = vsel %vm286, %v270, %v302
      %v319 = vsel %vm287, %v271, %v303
      %v320 = vsel %vm288, %v272, %v304
      %v321 = vsel %vm289, %v273, %v305
      %v322 = vsel %vm290, %v274, %v306
      %v323 = vsel %vm291, %v275, %v307
      %v324 = vsel %vm292, %v276, %v308
      %v325 = vpack.c.bf16 %v310, %v309
      %v326 = vpack.c.bf16 %v312, %v311
      %v327 = vpack.c.bf16 %v314, %v313
      %v328 = vpack.c.bf16 %v316, %v315
      %v329 = vpack.c.bf16 %v318, %v317
      %v330 = vpack.c.bf16 %v320, %v319
      %v331 = vpack.c.bf16 %v322, %v321
      %v332 = vpack.c.bf16 %v324, %v323
      %v341 = vunpack.c.l.b16 %v325
      %v342 = vunpack.c.h.b16 %v325
      %v343 = vunpack.c.l.b16 %v326
      %v344 = vunpack.c.h.b16 %v326
      %v345 = vunpack.c.l.b16 %v327
      %v346 = vunpack.c.h.b16 %v327
      %v347 = vunpack.c.l.b16 %v328
      %v348 = vunpack.c.h.b16 %v328
      %v349 = vunpack.c.l.b16 %v329
      %v350 = vunpack.c.h.b16 %v329
      %v351 = vunpack.c.l.b16 %v330
      %v352 = vunpack.c.h.b16 %v330
      %v353 = vunpack.c.l.b16 %v331
      %v354 = vunpack.c.h.b16 %v331
      %v355 = vunpack.c.l.b16 %v332
      %v356 = vunpack.c.h.b16 %v332
      %v357 = vpack.c.b16 %v341, %v341
      %v358 = vpack.c.b16 %v342, %v342
      %v359 = vpack.c.b16 %v343, %v343
      %v360 = vpack.c.b16 %v344, %v344
      %v361 = vpack.c.b16 %v345, %v345
      %v362 = vpack.c.b16 %v346, %v346
      %v363 = vpack.c.b16 %v347, %v347
      %v364 = vpack.c.b16 %v348, %v348
      %v365 = vpack.c.b16 %v349, %v349
      %v366 = vpack.c.b16 %v350, %v350
      %v367 = vpack.c.b16 %v351, %v351
      %v368 = vpack.c.b16 %v352, %v352
      %v369 = vpack.c.b16 %v353, %v353
      %v370 = vpack.c.b16 %v354, %v354
      %v371 = vpack.c.b16 %v355, %v355
      %v372 = vpack.c.b16 %v356, %v356
      %389 = vst [vmem:[%s213] sm:$0xf] %v357
      %390 = vst [vmem:[%s213 + $0x4] sm:$0xf] %v358
      %391 = vst [vmem:[%s213 + $0x8] sm:$0xf] %v359
      %392 = vst [vmem:[%s213 + $0xc] sm:$0xf] %v360
      %393 = vst [vmem:[%s213 + $0x10] sm:$0xf] %v361
      %394 = vst [vmem:[%s213 + $0x14] sm:$0xf] %v362
      %395 = vst [vmem:[%s213 + $0x18] sm:$0xf] %v363
      %396 = vst [vmem:[%s213 + $0x1c] sm:$0xf] %v364
      %397 = vst [vmem:[%s213 + $0x20] sm:$0xf] %v365
      %398 = vst [vmem:[%s213 + $0x24] sm:$0xf] %v366
      %399 = vst [vmem:[%s213 + $0x28] sm:$0xf] %v367
      %400 = vst [vmem:[%s213 + $0x2c] sm:$0xf] %v368
      %401 = vst [vmem:[%s213 + $0x30] sm:$0xf] %v369
      %402 = vst [vmem:[%s213 + $0x34] sm:$0xf] %v370
      %403 = vst [vmem:[%s213 + $0x38] sm:$0xf] %v371
      %404 = vst [vmem:[%s213 + $0x3c] sm:$0xf] %v372
      %s405 = smul.u32 8, %s19
      %p406 = scmp.lt.s32.totalorder %s18, 1
      %s407 = scalar_select %p406, %s18, 1
      %p408 = scmp.lt.s32.totalorder %s405, 15
      %s409 = scalar_select %p408, %s405, 15
      %s410 = smul.addr %s409, 2
      %s411 = smul.addr %s407, 32
      %s412 = sadd.s32 %s410, %s411
      %s413 = smul.addr %s412, 4
      %s414 = scalar_lea.vmem %s3, %s413
      // Predicated region
      $region33: #{conv_block_forward.5} parent=31 // pred_check
        %p415 = pneg %p116
      $region34: #{conv_block_forward.5} parent=31 // pred_check_branch
        %417 = sbr.rel (%p415) target = $region36
      $region35: #{conv_block_forward.5} parent=31 // pred_region
        %s418 = smul.u32 8, %s19
      $region36: #{conv_block_forward.5} parent=31 // pred_fallthru
        _
    $region32: #{conv_block_forward.5} parent=5 // pred_fallthru
      _
    %p419 = scmp.le.s32.totalorder 2, %s9
    // Predicated region
    $region37: #{conv_block_forward.5} parent=5 // pred_check
      %p420 = pneg %p419
    $region38: #{conv_block_forward.5} parent=5 // pred_check_branch
      %422 = sbr.rel (%p420) target = $region40
    $region39: #{conv_block_forward.5} parent=5 // pred_region
      %s423 = ssub.s32 %s9, 2
      // Predicated region
      $region41: #{conv_block_forward.5} parent=39 // pred_check
        %p424 = pneg %p122
      $region42: #{conv_block_forward.5} parent=39 // pred_check_branch
        %426 = sbr.rel (%p424) target = $region44
      $region43: #{conv_block_forward.5} parent=39 // pred_region
        %s427 = smul.u32 8, %s21
        %p428 = scmp.lt.s32.totalorder %s20, 1
        %s429 = scalar_select %p428, %s20, 1
        %p430 = scmp.lt.s32.totalorder %s427, 15
        %s431 = scalar_select %p430, %s427, 15
        %s432 = smul.addr %s431, 2
        %s433 = smul.addr %s429, 32
        %s434 = sadd.s32 %s432, %s433
        %s435 = smul.addr %s434, 4
        %s436 = scalar_lea.vmem %s3, %s435
      $region44: #{conv_block_forward.5} parent=39 // pred_fallthru
        _
    $region40: #{conv_block_forward.5} parent=5 // pred_fallthru
      _
  $region6: #{conv_block_forward.5} parent=0 // loop_footer
    %s13 = sadd.s32 1, %s9
  $region7: #{conv_block_forward.5} parent=0 // loop_footer_branch
    %8 = sbr.rel target = $region3
  $region8: #{conv_block_forward.5} parent=0 // loop_exit
    _

// kernel: conv_block_forward.7
$region0: #{conv_block_forward.7}
  #allocation0 [shape = 'u32[]', space=smem, size = 0x4, offset = 0x4, fixed_abs, tag = 'smem constant byte address 0x4 - core index']
  #allocation1 [shape = 'u32[144,128]{1,0:T(1,128)}', space=vmem, size = 0x12000, scoped, tag = 'internal scratch']
  %s0 = inlined_call_operand.vmem [shape: f32[2,16,16,128], index: 0, kind: input, shape index: {}]
  %s1 = inlined_call_operand.vmem [shape: f32[1,128], index: 1, kind: input, shape index: {}]
  %s2 = inlined_call_operand.vmem [shape: f32[1,128], index: 2, kind: input, shape index: {}]
  %s3 = inlined_call_operand.vmem [shape: f32[2,16,16,128], index: 3, kind: output, shape index: {}]
  %s4 = sld [smem:[#allocation0]]
  $region45: #{conv_block_forward.7} parent=0
    _
  %s6 = ssub.s32 1, %s4
  %s7 = scalar_select 0, %s6, %s4
  loop: start=0, step=1, limit=6
  $region2: #{conv_block_forward.7} parent=0 // loop_pre_header
    _
  $region3: #{conv_block_forward.7} parent=0 // loop_header
    %s9 = sphi 0, %s13
    %p10 = scmp.ge.s32.totalorder %s9, 6
    %s16 = sphi 0, %s28
    %s17 = sphi 0, %s24
    %s18 = sphi 0, %s16
    %s19 = sphi 0, %s17
    %s20 = sphi 0, %s18
    %s21 = sphi 0, %s19
    %s33 = sphi 0, %s35
    %s36 = sphi 0, %s33
    %s37 = sphi 0, %s36
    %s53 = sphi 0, %s37
    %s57 = sphi 0, %s57
    %s59 = sphi 0, %s57
    %s60 = sphi 0, %s59
    %s74 = sphi 0, %s60
    %s78 = sphi 0, %s78
    %s80 = sphi 0, %s78
    %s81 = sphi 0, %s80
    %s95 = sphi 0, %s81
    %s103 = sphi 0, %s105
    %s106 = sphi 0, %s103
    %s107 = sphi 0, %s106
    %s123 = sphi 0, %s107
  $region4: #{conv_block_forward.7} parent=0 // loop_header_branch
    %12 = sbr.rel (%p10) target = $region8
  $region5: #{conv_block_forward.7} parent=0 // loop_body
    %s14 = ssub.s32 %s9, 1
    %s15 = ssub.s32 %s9, 2
    %s22 = sadd.s32 1, %s17
    %p23 = scmp.ge.s32.totalorder %s22, 2
    %s24 = scalar_select %p23, 0, %s22
    %s25 = sadd.s32 1, %s16
    %s26 = scalar_select %p23, %s25, %s16
    %p27 = scmp.ge.s32.totalorder %s26, 2
    %s28 = scalar_select %p27, 0, %s26
    %s29 = ssub.s32 %s16, %s28
    %s30 = ssub.s32 %s17, %s24
    %s31 = sor.u32 %s29, %s30
    %p32 = scmp.eq.s32.totalorder %s31, 0
    %s34 = sadd.s32 %s33, 1
    %s35 = scalar_select %p32, %s33, %s34
    %p38 = pneg %p32
    %p39 = scmp.eq.s32.totalorder %s9, 3
    %p40 = por %p38, %p39
    %p41 = scmp.ne.s32.totalorder %s33, %s36
    %p42 = scmp.eq.s32.totalorder %s9, 0
    %p43 = por %p41, %p42
    %p44 = scmp.ne.s32.totalorder %s33, %s36
    %p45 = scmp.eq.s32.totalorder %s14, 3
    %p46 = por %p44, %p45
    %p47 = scmp.ne.s32.totalorder %s36, %s37
    %p48 = scmp.eq.s32.totalorder %s14, 0
    %p49 = por %p47, %p48
    %p50 = scmp.ne.s32.totalorder %s36, %s37
    %p51 = scmp.eq.s32.totalorder %s15, 3
    %p52 = por %p50, %p51
    %p54 = scmp.ne.s32.totalorder %s37, %s53
    %p55 = scmp.eq.s32.totalorder %s15, 0
    %p56 = por %p54, %p55
    %s58 = sadd.s32 %s57, 1
    %p61 = scmp.eq.s32.totalorder %s9, 3
    %p62 = scmp.ne.s32.totalorder %s57, %s59
    %p63 = scmp.eq.s32.totalorder %s9, 0
    %p64 = por %p62, %p63
    %p65 = scmp.ne.s32.totalorder %s57, %s59
    %p66 = scmp.eq.s32.totalorder %s14, 3
    %p67 = por %p65, %p66
    %p68 = scmp.ne.s32.totalorder %s59, %s60
    %p69 = scmp.eq.s32.totalorder %s14, 0
    %p70 = por %p68, %p69
    %p71 = scmp.ne.s32.totalorder %s59, %s60
    %p72 = scmp.eq.s32.totalorder %s15, 3
    %p73 = por %p71, %p72
    %p75 = scmp.ne.s32.totalorder %s60, %s74
    %p76 = scmp.eq.s32.totalorder %s15, 0
    %p77 = por %p75, %p76
    %s79 = sadd.s32 %s78, 1
    %p82 = scmp.eq.s32.totalorder %s9, 3
    %p83 = scmp.ne.s32.totalorder %s78, %s80
    %p84 = scmp.eq.s32.totalorder %s9, 0
    %p85 = por %p83, %p84
    %p86 = scmp.ne.s32.totalorder %s78, %s80
    %p87 = scmp.eq.s32.totalorder %s14, 3
    %p88 = por %p86, %p87
    %p89 = scmp.ne.s32.totalorder %s80, %s81
    %p90 = scmp.eq.s32.totalorder %s14, 0
    %p91 = por %p89, %p90
    %p92 = scmp.ne.s32.totalorder %s80, %s81
    %p93 = scmp.eq.s32.totalorder %s15, 3
    %p94 = por %p92, %p93
    %p96 = scmp.ne.s32.totalorder %s81, %s95
    %p97 = scmp.eq.s32.totalorder %s15, 0
    %p98 = por %p96, %p97
    %s99 = ssub.s32 %s16, %s28
    %s100 = ssub.s32 %s17, %s24
    %s101 = sor.u32 %s99, %s100
    %p102 = scmp.eq.s32.totalorder %s101, 0
    %s104 = sadd.s32 %s103, 1
    %s105 = scalar_select %p102, %s103, %s104
    %p108 = pneg %p102
    %p109 = scmp.eq.s32.totalorder %s9, 3
    %p110 = por %p108, %p109
    %p111 = scmp.ne.s32.totalorder %s103, %s106
    %p112 = scmp.eq.s32.totalorder %s9, 0
    %p113 = por %p111, %p112
    %p114 = scmp.ne.s32.totalorder %s103, %s106
    %p115 = scmp.eq.s32.totalorder %s14, 3
    %p116 = por %p114, %p115
    %p117 = scmp.ne.s32.totalorder %s106, %s107
    %p118 = scmp.eq.s32.totalorder %s14, 0
    %p119 = por %p117, %p118
    %p120 = scmp.ne.s32.totalorder %s106, %s107
    %p121 = scmp.eq.s32.totalorder %s15, 3
    %p122 = por %p120, %p121
    %p124 = scmp.ne.s32.totalorder %s107, %s123
    %p125 = scmp.eq.s32.totalorder %s15, 0
    %p126 = por %p124, %p125
    %p127 = scmp.le.s32.totalorder 1, %s9
    %p128 = scmp.lt.s32.totalorder %s9, 5
    %p129 = pnand %p127, %p128
    %p130 = pneg %p129
    // Predicated region
    $region9: #{conv_block_forward.7} parent=5 // pred_check
      _
    $region10: #{conv_block_forward.7} parent=5 // pred_check_branch
      %132 = sbr.rel (%p129) target = $region12
    $region11: #{conv_block_forward.7} parent=5 // pred_region
      %s133 = ssub.s32 %s9, 1
      // Predicated region
      $region13: #{conv_block_forward.7} parent=11 // pred_check
        %p134 = pneg %p70
      $region14: #{conv_block_forward.7} parent=11 // pred_check_branch
        %136 = sbr.rel (%p134) target = $region16
      $region15: #{conv_block_forward.7} parent=11 // pred_region
        _
      $region16: #{conv_block_forward.7} parent=11 // pred_fallthru
        _
      // Predicated region
      $region17: #{conv_block_forward.7} parent=11 // pred_check
        %p137 = pneg %p91
      $region18: #{conv_block_forward.7} parent=11 // pred_check_branch
        %139 = sbr.rel (%p137) target = $region20
      $region19: #{conv_block_forward.7} parent=11 // pred_region
        _
      $region20: #{conv_block_forward.7} parent=11 // pred_fallthru
        _
    $region12: #{conv_block_forward.7} parent=5 // pred_fallthru
      _
    %p140 = scmp.lt.s32.totalorder %s9, 4
    // Predicated region
    $region21: #{conv_block_forward.7} parent=5 // pred_check
      %p141 = pneg %p140
    $region22: #{conv_block_forward.7} parent=5 // pred_check_branch
      %143 = sbr.rel (%p141) target = $region24
    $region23: #{conv_block_forward.7} parent=5 // pred_region
      // Predicated region
      $region25: #{conv_block_forward.7} parent=23 // pred_check
        %p144 = pneg %p43
      $region26: #{conv_block_forward.7} parent=23 // pred_check_branch
        %146 = sbr.rel (%p144) target = $region28
      $region27: #{conv_block_forward.7} parent=23 // pred_region
        %s147 = smul.u32 8, %s17
        %p148 = scmp.lt.s32.totalorder %s16, 1
        %s149 = scalar_select %p148, %s16, 1
        %p150 = scmp.lt.s32.totalorder %s147, 15
        %s151 = scalar_select %p150, %s147, 15
        %s152 = smul.addr %s151, 2
        %s153 = smul.addr %s149, 32
        %s154 = sadd.s32 %s152, %s153
        %s155 = smul.addr %s154, 8
        %s156 = scalar_lea.vmem %s0, %s155
        %s157 = smul.u32 8, %s17
      $region28: #{conv_block_forward.7} parent=23 // pred_fallthru
        _
    $region24: #{conv_block_forward.7} parent=5 // pred_fallthru
      _
    %p158 = scmp.le.s32.totalorder 1, %s9
    %p159 = scmp.lt.s32.totalorder %s9, 5
    %p160 = pnand %p158, %p159
    %p161 = pneg %p160
    // Predicated region
    $region29: #{conv_block_forward.7} parent=5 // pred_check
      _
    $region30: #{conv_block_forward.7} parent=5 // pred_check_branch
      %163 = sbr.rel (%p160) target = $region32
    $region31: #{conv_block_forward.7} parent=5 // pred_region
      %s164 = ssub.s32 %s9, 1
      %s165 = smul.u32 8, %s19
      %p166 = scmp.lt.s32.totalorder %s18, 1
      %s167 = scalar_select %p166, %s18, 1
      %p168 = scmp.lt.s32.totalorder %s165, 15
      %s169 = scalar_select %p168, %s165, 15
      %s170 = smul.addr %s169, 2
      %s171 = smul.addr %s167, 32
      %s172 = sadd.s32 %s170, %s171
      %s173 = smul.addr %s172, 8
      %s174 = scalar_lea.vmem %s0, %s173
      %p175 = pneg %p49
      %p176 = pneg %p46
      %p177 = pneg %p70
      %p178 = pneg %p67
      %p179 = pneg %p91
      %p180 = pneg %p88
      %p181 = pneg %p119
      %p182 = pneg %p116
      %s183 = smul.u32 8, %s19
      %p184 = scmp.lt.s32.totalorder %s18, 1
      %s185 = scalar_select %p184, %s18, 1
      %p186 = scmp.lt.s32.totalorder %s183, 15
      %s187 = scalar_select %p186, %s183, 15
      %s188 = smul.addr %s187, 2
      %s189 = smul.addr %s185, 32
      %s190 = sadd.s32 %s188, %s189
      %s191 = smul.addr %s190, 8
      %s192 = scalar_lea.vmem %s3, %s191
      %s193 = smul.u32 8, %s19
      %p194 = scmp.lt.s32.totalorder %s18, 1
      %s195 = scalar_select %p194, %s18, 1
      %p196 = scmp.lt.s32.totalorder %s193, 15
      %s197 = scalar_select %p196, %s193, 15
      %s198 = smul.addr %s197, 2
      %s199 = smul.addr %s195, 32
      %s200 = sadd.s32 %s198, %s199
      %s201 = smul.addr %s200, 8
      %s202 = scalar_lea.vmem %s0, %s201
      %s203 = smul.u32 8, %s19
      %s204 = smul.u32 8, %s19
      %p205 = scmp.lt.s32.totalorder %s18, 1
      %s206 = scalar_select %p205, %s18, 1
      %p207 = scmp.lt.s32.totalorder %s204, 15
      %s208 = scalar_select %p207, %s204, 15
      %s209 = smul.addr %s208, 2
      %s210 = smul.addr %s206, 32
      %s211 = sadd.s32 %s209, %s210
      %s212 = smul.addr %s211, 8
      %s213 = scalar_lea.vmem %s3, %s212
      %s214 = smul.u32 8, %s19
      %v215 = vld [vmem:[%s202] sm:$0xff]
      %v216 = vld [vmem:[%s202 + $0x8] sm:$0xff]
      %v217 = vld [vmem:[%s202 + $0x10] sm:$0xff]
      %v218 = vld [vmem:[%s202 + $0x18] sm:$0xff]
      %v219 = vld [vmem:[%s202 + $0x20] sm:$0xff]
      %v220 = vld [vmem:[%s202 + $0x28] sm:$0xff]
      %v221 = vld [vmem:[%s202 + $0x30] sm:$0xff]
      %v222 = vld [vmem:[%s202 + $0x38] sm:$0xff]
      %v223 = vld [vmem:[%s202 + $0x40] sm:$0xff]
      %v224 = vld [vmem:[%s202 + $0x48] sm:$0xff]
      %v225 = vld [vmem:[%s202 + $0x50] sm:$0xff]
      %v226 = vld [vmem:[%s202 + $0x58] sm:$0xff]
      %v227 = vld [vmem:[%s202 + $0x60] sm:$0xff]
      %v228 = vld [vmem:[%s202 + $0x68] sm:$0xff]
      %v229 = vld [vmem:[%s202 + $0x70] sm:$0xff]
      %v230 = vld [vmem:[%s202 + $0x78] sm:$0xff]
      %v231 = vld [vmem:[%s1] sm:$0x1]
      %v233 = vlaneseq
      %v234 = vshrl.u32 %v233, 7
      %v235 = vsub.s32 0, %v234
      %v236 = vrot.slane %v231, %v235
      %v238 = vmul.f32 %v215, %v236
      %v239 = vmul.f32 %v216, %v236
      %v240 = vmul.f32 %v217, %v236
      %v241 = vmul.f32 %v218, %v236
      %v242 = vmul.f32 %v219, %v236
      %v243 = vmul.f32 %v220, %v236
      %v244 = vmul.f32 %v221, %v236
      %v245 = vmul.f32 %v222, %v236
      %v246 = vmul.f32 %v223, %v236
      %v247 = vmul.f32 %v224, %v236
      %v248 = vmul.f32 %v225, %v236
      %v249 = vmul.f32 %v226, %v236
      %v250 = vmul.f32 %v227, %v236
      %v251 = vmul.f32 %v228, %v236
      %v252 = vmul.f32 %v229, %v236
      %v253 = vmul.f32 %v230, %v236
      %v254 = vld [vmem:[%s2] sm:$0x1]
      %v256 = vlaneseq
      %v257 = vshrl.u32 %v256, 7
      %v258 = vsub.s32 0, %v257
      %v259 = vrot.slane %v254, %v258
      %v261 = vadd.f32 %v238, %v259
      %v262 = vadd.f32 %v239, %v259
      %v263 = vadd.f32 %v240, %v259
      %v264 = vadd.f32 %v241, %v259
      %v265 = vadd.f32 %v242, %v259
      %v266 = vadd.f32 %v243, %v259
      %v267 = vadd.f32 %v244, %v259
      %v268 = vadd.f32 %v245, %v259
      %v269 = vadd.f32 %v246, %v259
      %v270 = vadd.f32 %v247, %v259
      %v271 = vadd.f32 %v248, %v259
      %v272 = vadd.f32 %v249, %v259
      %v273 = vadd.f32 %v250, %v259
      %v274 = vadd.f32 %v251, %v259
      %v275 = vadd.f32 %v252, %v259
      %v276 = vadd.f32 %v253, %v259
      %vm277 = vcmp.gt.f32.partialorder %v261, 0.0
      %vm278 = vcmp.gt.f32.partialorder %v262, 0.0
      %vm279 = vcmp.gt.f32.partialorder %v263, 0.0
      %vm280 = vcmp.gt.f32.partialorder %v264, 0.0
      %vm281 = vcmp.gt.f32.partialorder %v265, 0.0
      %vm282 = vcmp.gt.f32.partialorder %v266, 0.0
      %vm283 = vcmp.gt.f32.partialorder %v267, 0.0
      %vm284 = vcmp.gt.f32.partialorder %v268, 0.0
      %vm285 = vcmp.gt.f32.partialorder %v269, 0.0
      %vm286 = vcmp.gt.f32.partialorder %v270, 0.0
      %vm287 = vcmp.gt.f32.partialorder %v271, 0.0
      %vm288 = vcmp.gt.f32.partialorder %v272, 0.0
      %vm289 = vcmp.gt.f32.partialorder %v273, 0.0
      %vm290 = vcmp.gt.f32.partialorder %v274, 0.0
      %vm291 = vcmp.gt.f32.partialorder %v275, 0.0
      %vm292 = vcmp.gt.f32.partialorder %v276, 0.0
      %v293 = vmul.f32 %v261, 0.01
      %v294 = vmul.f32 %v262, 0.01
      %v295 = vmul.f32 %v263, 0.01
      %v296 = vmul.f32 %v264, 0.01
      %v297 = vmul.f32 %v265, 0.01
      %v298 = vmul.f32 %v266, 0.01
      %v299 = vmul.f32 %v267, 0.01
      %v300 = vmul.f32 %v268, 0.01
      %v301 = vmul.f32 %v269, 0.01
      %v302 = vmul.f32 %v270, 0.01
      %v303 = vmul.f32 %v271, 0.01
      %v304 = vmul.f32 %v272, 0.01
      %v305 = vmul.f32 %v273, 0.01
      %v306 = vmul.f32 %v274, 0.01
      %v307 = vmul.f32 %v275, 0.01
      %v308 = vmul.f32 %v276, 0.01
      %v309 = vsel %vm277, %v261, %v293
      %v310 = vsel %vm278, %v262, %v294
      %v311 = vsel %vm279, %v263, %v295
      %v312 = vsel %vm280, %v264, %v296
      %v313 = vsel %vm281, %v265, %v297
      %v314 = vsel %vm282, %v266, %v298
      %v315 = vsel %vm283, %v267, %v299
      %v316 = vsel %vm284, %v268, %v300
      %v317 = vsel %vm285, %v269, %v301
      %v318 = vsel %vm286, %v270, %v302
      %v319 = vsel %vm287, %v271, %v303
      %v320 = vsel %vm288, %v272, %v304
      %v321 = vsel %vm289, %v273, %v305
      %v322 = vsel %vm290, %v274, %v306
      %v323 = vsel %vm291, %v275, %v307
      %v324 = vsel %vm292, %v276, %v308
      %325 = vst [vmem:[%s213] sm:$0xff] %v309
      %326 = vst [vmem:[%s213 + $0x8] sm:$0xff] %v310
      %327 = vst [vmem:[%s213 + $0x10] sm:$0xff] %v311
      %328 = vst [vmem:[%s213 + $0x18] sm:$0xff] %v312
      %329 = vst [vmem:[%s213 + $0x20] sm:$0xff] %v313
      %330 = vst [vmem:[%s213 + $0x28] sm:$0xff] %v314
      %331 = vst [vmem:[%s213 + $0x30] sm:$0xff] %v315
      %332 = vst [vmem:[%s213 + $0x38] sm:$0xff] %v316
      %333 = vst [vmem:[%s213 + $0x40] sm:$0xff] %v317
      %334 = vst [vmem:[%s213 + $0x48] sm:$0xff] %v318
      %335 = vst [vmem:[%s213 + $0x50] sm:$0xff] %v319
      %336 = vst [vmem:[%s213 + $0x58] sm:$0xff] %v320
      %337 = vst [vmem:[%s213 + $0x60] sm:$0xff] %v321
      %338 = vst [vmem:[%s213 + $0x68] sm:$0xff] %v322
      %339 = vst [vmem:[%s213 + $0x70] sm:$0xff] %v323
      %340 = vst [vmem:[%s213 + $0x78] sm:$0xff] %v324
      %s341 = smul.u32 8, %s19
      %p342 = scmp.lt.s32.totalorder %s18, 1
      %s343 = scalar_select %p342, %s18, 1
      %p344 = scmp.lt.s32.totalorder %s341, 15
      %s345 = scalar_select %p344, %s341, 15
      %s346 = smul.addr %s345, 2
      %s347 = smul.addr %s343, 32
      %s348 = sadd.s32 %s346, %s347
      %s349 = smul.addr %s348, 8
      %s350 = scalar_lea.vmem %s3, %s349
      // Predicated region
      $region33: #{conv_block_forward.7} parent=31 // pred_check
        %p351 = pneg %p116
      $region34: #{conv_block_forward.7} parent=31 // pred_check_branch
        %353 = sbr.rel (%p351) target = $region36
      $region35: #{conv_block_forward.7} parent=31 // pred_region
        %s354 = smul.u32 8, %s19
      $region36: #{conv_block_forward.7} parent=31 // pred_fallthru
        _
    $region32: #{conv_block_forward.7} parent=5 // pred_fallthru
      _
    %p355 = scmp.le.s32.totalorder 2, %s9
    // Predicated region
    $region37: #{conv_block_forward.7} parent=5 // pred_check
      %p356 = pneg %p355
    $region38: #{conv_block_forward.7} parent=5 // pred_check_branch
      %358 = sbr.rel (%p356) target = $region40
    $region39: #{conv_block_forward.7} parent=5 // pred_region
      %s359 = ssub.s32 %s9, 2
      // Predicated region
      $region41: #{conv_block_forward.7} parent=39 // pred_check
        %p360 = pneg %p122
      $region42: #{conv_block_forward.7} parent=39 // pred_check_branch
        %362 = sbr.rel (%p360) target = $region44
      $region43: #{conv_block_forward.7} parent=39 // pred_region
        %s363 = smul.u32 8, %s21
        %p364 = scmp.lt.s32.totalorder %s20, 1
        %s365 = scalar_select %p364, %s20, 1
        %p366 = scmp.lt.s32.totalorder %s363, 15
        %s367 = scalar_select %p366, %s363, 15
        %s368 = smul.addr %s367, 2
        %s369 = smul.addr %s365, 32
        %s370 = sadd.s32 %s368, %s369
        %s371 = smul.addr %s370, 8
        %s372 = scalar_lea.vmem %s3, %s371
      $region44: #{conv_block_forward.7} parent=39 // pred_fallthru
        _
    $region40: #{conv_block_forward.7} parent=5 // pred_fallthru
      _
  $region6: #{conv_block_forward.7} parent=0 // loop_footer
    %s13 = sadd.s32 1, %s9
  $region7: #{conv_block_forward.7} parent=0 // loop_footer_branch
    %8 = sbr.rel target = $region3
  $region8: #{conv_block_forward.7} parent=0 // loop_exit
    _

// kernel: conv_block_forward.4
$region0: #{conv_block_forward.4}
  #allocation0 [shape = 'u32[]', space=smem, size = 0x4, offset = 0x4, fixed_abs, tag = 'smem constant byte address 0x4 - core index']
  #allocation1 [shape = 'u32[144,128]{1,0:T(1,128)}', space=vmem, size = 0x12000, scoped, tag = 'internal scratch']
  %s0 = inlined_call_operand.vmem [shape: bf16[2,2,10,18,128], index: 0, kind: input, shape index: {}]
  %s1 = inlined_call_operand.vmem [shape: bf16[1152,128], index: 1, kind: input, shape index: {}]
  %s2 = inlined_call_operand.vmem [shape: f32[2,16,16,128], index: 2, kind: output, shape index: {0}]
  %s3 = inlined_call_operand.vmem [shape: f32[2,2,2,128], index: 3, kind: output, shape index: {1}]
  %4 = xla_tuple %s2, %s3
  %s5 = sld [smem:[#allocation0]]
  $region49: #{conv_block_forward.4} parent=0
    _
  %s7 = ssub.s32 1, %s5
  %s8 = scalar_select 0, %s7, %s5
  loop: start=0, step=1, limit=6
  $region2: #{conv_block_forward.4} parent=0 // loop_pre_header
    _
  $region3: #{conv_block_forward.4} parent=0 // loop_header
    %s10 = sphi 0, %s14
    %p11 = scmp.ge.s32.totalorder %s10, 6
    %s17 = sphi 0, %s29
    %s18 = sphi 0, %s25
    %s19 = sphi 0, %s17
    %s20 = sphi 0, %s18
    %s21 = sphi 0, %s19
    %s22 = sphi 0, %s20
    %s34 = sphi 0, %s36
    %s37 = sphi 0, %s34
    %s38 = sphi 0, %s37
    %s54 = sphi 0, %s38
    %s58 = sphi 0, %s58
    %s60 = sphi 0, %s58
    %s61 = sphi 0, %s60
    %s75 = sphi 0, %s61
    %s83 = sphi 0, %s85
    %s86 = sphi 0, %s83
    %s87 = sphi 0, %s86
    %s103 = sphi 0, %s87
    %s111 = sphi 0, %s113
    %s114 = sphi 0, %s111
    %s115 = sphi 0, %s114
    %s131 = sphi 0, %s115
  $region4: #{conv_block_forward.4} parent=0 // loop_header_branch
    %13 = sbr.rel (%p11) target = $region8
  $region5: #{conv_block_forward.4} parent=0 // loop_body
    %s15 = ssub.s32 %s10, 1
    %s16 = ssub.s32 %s10, 2
    %s23 = sadd.s32 1, %s18
    %p24 = scmp.ge.s32.totalorder %s23, 2
    %s25 = scalar_select %p24, 0, %s23
    %s26 = sadd.s32 1, %s17
    %s27 = scalar_select %p24, %s26, %s17
    %p28 = scmp.ge.s32.totalorder %s27, 2
    %s29 = scalar_select %p28, 0, %s27
    %s30 = ssub.s32 %s17, %s29
    %s31 = ssub.s32 %s18, %s25
    %s32 = sor.u32 %s30, %s31
    %p33 = scmp.eq.s32.totalorder %s32, 0
    %s35 = sadd.s32 %s34, 1
    %s36 = scalar_select %p33, %s34, %s35
    %p39 = pneg %p33
    %p40 = scmp.eq.s32.totalorder %s10, 3
    %p41 = por %p39, %p40
    %p42 = scmp.ne.s32.totalorder %s34, %s37
    %p43 = scmp.eq.s32.totalorder %s10, 0
    %p44 = por %p42, %p43
    %p45 = scmp.ne.s32.totalorder %s34, %s37
    %p46 = scmp.eq.s32.totalorder %s15, 3
    %p47 = por %p45, %p46
    %p48 = scmp.ne.s32.totalorder %s37, %s38
    %p49 = scmp.eq.s32.totalorder %s15, 0
    %p50 = por %p48, %p49
    %p51 = scmp.ne.s32.totalorder %s37, %s38
    %p52 = scmp.eq.s32.totalorder %s16, 3
    %p53 = por %p51, %p52
    %p55 = scmp.ne.s32.totalorder %s38, %s54
    %p56 = scmp.eq.s32.totalorder %s16, 0
    %p57 = por %p55, %p56
    %s59 = sadd.s32 %s58, 1
    %p62 = scmp.eq.s32.totalorder %s10, 3
    %p63 = scmp.ne.s32.totalorder %s58, %s60
    %p64 = scmp.eq.s32.totalorder %s10, 0
    %p65 = por %p63, %p64
    %p66 = scmp.ne.s32.totalorder %s58, %s60
    %p67 = scmp.eq.s32.totalorder %s15, 3
    %p68 = por %p66, %p67
    %p69 = scmp.ne.s32.totalorder %s60, %s61
    %p70 = scmp.eq.s32.totalorder %s15, 0
    %p71 = por %p69, %p70
    %p72 = scmp.ne.s32.totalorder %s60, %s61
    %p73 = scmp.eq.s32.totalorder %s16, 3
    %p74 = por %p72, %p73
    %p76 = scmp.ne.s32.totalorder %s61, %s75
    %p77 = scmp.eq.s32.totalorder %s16, 0
    %p78 = por %p76, %p77
    %s79 = ssub.s32 %s17, %s29
    %s80 = ssub.s32 %s18, %s25
    %s81 = sor.u32 %s79, %s80
    %p82 = scmp.eq.s32.totalorder %s81, 0
    %s84 = sadd.s32 %s83, 1
    %s85 = scalar_select %p82, %s83, %s84
    %p88 = pneg %p82
    %p89 = scmp.eq.s32.totalorder %s10, 3
    %p90 = por %p88, %p89
    %p91 = scmp.ne.s32.totalorder %s83, %s86
    %p92 = scmp.eq.s32.totalorder %s10, 0
    %p93 = por %p91, %p92
    %p94 = scmp.ne.s32.totalorder %s83, %s86
    %p95 = scmp.eq.s32.totalorder %s15, 3
    %p96 = por %p94, %p95
    %p97 = scmp.ne.s32.totalorder %s86, %s87
    %p98 = scmp.eq.s32.totalorder %s15, 0
    %p99 = por %p97, %p98
    %p100 = scmp.ne.s32.totalorder %s86, %s87
    %p101 = scmp.eq.s32.totalorder %s16, 3
    %p102 = por %p100, %p101
    %p104 = scmp.ne.s32.totalorder %s87, %s103
    %p105 = scmp.eq.s32.totalorder %s16, 0
    %p106 = por %p104, %p105
    %s107 = ssub.s32 %s17, %s29
    %s108 = ssub.s32 %s18, %s25
    %s109 = sor.u32 %s107, %s108
    %p110 = scmp.eq.s32.totalorder %s109, 0
    %s112 = sadd.s32 %s111, 1
    %s113 = scalar_select %p110, %s111, %s112
    %p116 = pneg %p110
    %p117 = scmp.eq.s32.totalorder %s10, 3
    %p118 = por %p116, %p117
    %p119 = scmp.ne.s32.totalorder %s111, %s114
    %p120 = scmp.eq.s32.totalorder %s10, 0
    %p121 = por %p119, %p120
    %p122 = scmp.ne.s32.totalorder %s111, %s114
    %p123 = scmp.eq.s32.totalorder %s15, 3
    %p124 = por %p122, %p123
    %p125 = scmp.ne.s32.totalorder %s114, %s115
    %p126 = scmp.eq.s32.totalorder %s15, 0
    %p127 = por %p125, %p126
    %p128 = scmp.ne.s32.totalorder %s114, %s115
    %p129 = scmp.eq.s32.totalorder %s16, 3
    %p130 = por %p128, %p129
    %p132 = scmp.ne.s32.totalorder %s115, %s131
    %p133 = scmp.eq.s32.totalorder %s16, 0
    %p134 = por %p132, %p133
    %p135 = scmp.le.s32.totalorder 1, %s10
    %p136 = scmp.lt.s32.totalorder %s10, 5
    %p137 = pnand %p135, %p136
    %p138 = pneg %p137
    // Predicated region
    $region9: #{conv_block_forward.4} parent=5 // pred_check
      _
    $region10: #{conv_block_forward.4} parent=5 // pred_check_branch
      %140 = sbr.rel (%p137) target = $region12
    $region11: #{conv_block_forward.4} parent=5 // pred_region
      %s141 = ssub.s32 %s10, 1
      // Predicated region
      $region13: #{conv_block_forward.4} parent=11 // pred_check
        %p142 = pneg %p71
      $region14: #{conv_block_forward.4} parent=11 // pred_check_branch
        %144 = sbr.rel (%p142) target = $region16
      $region15: #{conv_block_forward.4} parent=11 // pred_region
        _
      $region16: #{conv_block_forward.4} parent=11 // pred_fallthru
        _
    $region12: #{conv_block_forward.4} parent=5 // pred_fallthru
      _
    %p145 = scmp.lt.s32.totalorder %s10, 4
    // Predicated region
    $region17: #{conv_block_forward.4} parent=5 // pred_check
      %p146 = pneg %p145
    $region18: #{conv_block_forward.4} parent=5 // pred_check_branch
      %148 = sbr.rel (%p146) target = $region20
    $region19: #{conv_block_forward.4} parent=5 // pred_region
      // Predicated region
      $region21: #{conv_block_forward.4} parent=19 // pred_check
        %p149 = pneg %p44
      $region22: #{conv_block_forward.4} parent=19 // pred_check_branch
        %151 = sbr.rel (%p149) target = $region24
      $region23: #{conv_block_forward.4} parent=19 // pred_region
        %p152 = scmp.lt.s32.totalorder %s17, 1
        %s153 = scalar_select %p152, %s17, 1
        %p154 = scmp.lt.s32.totalorder %s18, 1
        %s155 = scalar_select %p154, %s18, 1
        %s156 = smul.addr %s155, 30
        %s157 = smul.addr %s153, 60
        %s158 = sadd.s32 %s156, %s157
        %s159 = smul.addr %s158, 4
        %s160 = scalar_lea.vmem %s0, %s159
      $region24: #{conv_block_forward.4} parent=19 // pred_fallthru
        _
    $region20: #{conv_block_forward.4} parent=5 // pred_fallthru
      _
    %p161 = scmp.le.s32.totalorder 1, %s10
    %p162 = scmp.lt.s32.totalorder %s10, 5
    %p163 = pnand %p161, %p162
    %p164 = pneg %p163
    // Predicated region
    $region25: #{conv_block_forward.4} parent=5 // pred_check
      _
    $region26: #{conv_block_forward.4} parent=5 // pred_check_branch
      %166 = sbr.rel (%p163) target = $region28
    $region27: #{conv_block_forward.4} parent=5 // pred_region
      %s167 = ssub.s32 %s10, 1
      %p168 = scmp.lt.s32.totalorder %s19, 1
      %s169 = scalar_select %p168, %s19, 1
      %p170 = scmp.lt.s32.totalorder %s20, 1
      %s171 = scalar_select %p170, %s20, 1
      %s172 = smul.addr %s171, 30
      %s173 = smul.addr %s169, 60
      %s174 = sadd.s32 %s172, %s173
      %s175 = smul.addr %s174, 4
      %s176 = scalar_lea.vmem %s0, %s175
      %p177 = pneg %p50
      %p178 = pneg %p47
      %p179 = pneg %p71
      %p180 = pneg %p68
      %p181 = pneg %p99
      %p182 = pneg %p96
      %s183 = smul.u32 8, %s20
      %p184 = scmp.lt.s32.totalorder %s19, 1
      %s185 = scalar_select %p184, %s19, 1
      %p186 = scmp.lt.s32.totalorder %s183, 15
      %s187 = scalar_select %p186, %s183, 15
      %s188 = smul.addr %s187, 2
      %s189 = smul.addr %s185, 32
      %s190 = sadd.s32 %s188, %s189
      %s191 = smul.addr %s190, 8
      %s192 = scalar_lea.vmem %s2, %s191
      %p193 = pneg %p127
      %p194 = pneg %p124
      %p195 = scmp.lt.s32.totalorder %s19, 1
      %s196 = scalar_select %p195, %s19, 1
      %p197 = scmp.lt.s32.totalorder %s20, 1
      %s198 = scalar_select %p197, %s20, 1
      %s199 = smul.addr %s196, 2
      %s200 = sadd.s32 %s198, %s199
      %s201 = smul.addr %s200, 2
      %s202 = scalar_lea.vmem %s3, %s201
      %p203 = scmp.lt.s32.totalorder %s19, 1
      %s204 = scalar_select %p203, %s19, 1
      %p205 = scmp.lt.s32.totalorder %s20, 1
      %s206 = scalar_select %p205, %s20, 1
      %s207 = smul.addr %s206, 30
      %s208 = smul.addr %s204, 60
      %s209 = sadd.s32 %s207, %s208
      %s210 = smul.addr %s209, 4
      %s211 = scalar_lea.vmem %s0, %s210
      %s212 = smul.u32 8, %s20
      %p213 = scmp.lt.s32.totalorder %s19, 1
      %s214 = scalar_select %p213, %s19, 1
      %p215 = scmp.lt.s32.totalorder %s212, 15
      %s216 = scalar_select %p215, %s212, 15
      %s217 = smul.addr %s216, 2
      %s218 = smul.addr %s214, 32
      %s219 = sadd.s32 %s217, %s218
      %s220 = smul.addr %s219, 8
      %s221 = scalar_lea.vmem %s2, %s220
      %s222 = smul.u32 8, %s20
      %p223 = scmp.lt.s32.totalorder %s19, 1
      %s224 = scalar_select %p223, %s19, 1
      %p225 = scmp.lt.s32.totalorder %s20, 1
      %s226 = scalar_select %p225, %s20, 1
      %s227 = smul.addr %s224, 2
      %s228 = sadd.s32 %s226, %s227
      %s229 = smul.addr %s228, 2
      %s230 = scalar_lea.vmem %s3, %s229
      %v232 = vld [vmem:[%s211] sm:$0xf]
      %v233 = vld [vmem:[%s211 + $0x4] sm:$0xf]
      %v234 = vld [vmem:[%s211 + $0x8] sm:$0x1]
      %v235 = vld [vmem:[%s211 + $0xc] sm:$0xf]
      %v236 = vld [vmem:[%s211 + $0x10] sm:$0xf]
      %v237 = vld [vmem:[%s211 + $0x14] sm:$0x1]
      %v238 = vld [vmem:[%s211 + $0x18] sm:$0xf]
      %v239 = vld [vmem:[%s211 + $0x1c] sm:$0xf]
      %v240 = vld [vmem:[%s211 + $0x20] sm:$0x1]
      %v241 = vld [vmem:[%s211 + $0x24] sm:$0xf]
      %v242 = vld [vmem:[%s211 + $0x28] sm:$0xf]
      %v243 = vld [vmem:[%s211 + $0x2c] sm:$0x1]
      %v244 = vld [vmem:[%s211 + $0x30] sm:$0xf]
      %v245 = vld [vmem:[%s211 + $0x34] sm:$0xf]
      %v246 = vld [vmem:[%s211 + $0x38] sm:$0x1]
      %v247 = vld [vmem:[%s211 + $0x3c] sm:$0xf]
      %v248 = vld [vmem:[%s211 + $0x40] sm:$0xf]
      %v249 = vld [vmem:[%s211 + $0x44] sm:$0x1]
      %v250 = vld [vmem:[%s211 + $0x48] sm:$0xf]
      %v251 = vld [vmem:[%s211 + $0x4c] sm:$0xf]
      %v252 = vld [vmem:[%s211 + $0x50] sm:$0x1]
      %v253 = vld [vmem:[%s211 + $0x54] sm:$0xf]
      %v254 = vld [vmem:[%s211 + $0x58] sm:$0xf]
      %v255 = vld [vmem:[%s211 + $0x5c] sm:$0x1]
      %v256 = vld [vmem:[%s211 + $0x60] sm:$0xf]
      %v257 = vld [vmem:[%s211 + $0x64] sm:$0xf]
      %v258 = vld [vmem:[%s211 + $0x68] sm:$0x1]
      %v259 = vld [vmem:[%s211 + $0x6c] sm:$0xf]
      %v260 = vld [vmem:[%s211 + $0x70] sm:$0xf]
      %v261 = vld [vmem:[%s211 + $0x74] sm:$0x1]
      %v278 = vunpack.c.l.b16 %v232
      %v279 = vunpack.c.l.b16 %v233
      %v280 = vunpack.c.l.b16 %v235
      %v281 = vunpack.c.l.b16 %v236
      %v282 = vunpack.c.l.b16 %v238
      %v283 = vunpack.c.l.b16 %v239
      %v284 = vunpack.c.l.b16 %v241
      %v285 = vunpack.c.l.b16 %v242
      %v286 = vunpack.c.l.b16 %v244
      %v287 = vunpack.c.l.b16 %v245
      %v288 = vunpack.c.l.b16 %v247
      %v289 = vunpack.c.l.b16 %v248
      %v290 = vunpack.c.l.b16 %v250
      %v291 = vunpack.c.l.b16 %v251
      %v292 = vunpack.c.l.b16 %v253
      %v293 = vunpack.c.l.b16 %v254
      %v294 = vpack.c.b16 %v279, %v278
      %v295 = vpack.c.b16 %v281, %v280
      %v296 = vpack.c.b16 %v283, %v282
      %v297 = vpack.c.b16 %v285, %v284
      %v298 = vpack.c.b16 %v287, %v286
      %v299 = vpack.c.b16 %v289, %v288
      %v300 = vpack.c.b16 %v291, %v290
      %v301 = vpack.c.b16 %v293, %v292
      %v318 = vunpack.c.l.b16 %v234
      %v319 = vunpack.c.l.b16 %v237
      %v320 = vunpack.c.l.b16 %v240
      %v321 = vunpack.c.l.b16 %v243
      %v322 = vunpack.c.l.b16 %v246
      %v323 = vunpack.c.l.b16 %v249
      %v324 = vunpack.c.l.b16 %v252
      %v325 = vunpack.c.l.b16 %v255
      %v326 = vpack.c.b16 %v318, %v318
      %v327 = vpack.c.b16 %v319, %v319
      %v328 = vpack.c.b16 %v320, %v320
      %v329 = vpack.c.b16 %v321, %v321
      %v330 = vpack.c.b16 %v322, %v322
      %v331 = vpack.c.b16 %v323, %v323
      %v332 = vpack.c.b16 %v324, %v324
      %v333 = vpack.c.b16 %v325, %v325
      %vm334 = vsmask.f32 7424
      %v336 = vshrl.u32 %v294, 16
      %v338 = vshll.u32 %v294, 16
      %v340 = vrot.slane %v338, 1
      %v341 = vor.u32 %v336, %v340
      %v343 = vshll.u32 %v326, 16
      %v345 = vrot.slane %v343, 1
      %v346 = vsel %vm334, %v341, %v345
      %v348 = vshrl.u32 %v295, 16
      %v350 = vshll.u32 %v295, 16
      %v352 = vrot.slane %v350, 1
      %v353 = vor.u32 %v348, %v352
      %v355 = vshll.u32 %v327, 16
      %v357 = vrot.slane %v355, 1
      %v358 = vsel %vm334, %v353, %v357
      %v360 = vshrl.u32 %v296, 16
      %v362 = vshll.u32 %v296, 16
      %v364 = vrot.slane %v362, 1
      %v365 = vor.u32 %v360, %v364
      %v367 = vshll.u32 %v328, 16
      %v369 = vrot.slane %v367, 1
      %v370 = vsel %vm334, %v365, %v369
      %v372 = vshrl.u32 %v297, 16
      %v374 = vshll.u32 %v297, 16
      %v376 = vrot.slane %v374, 1
      %v377 = vor.u32 %v372, %v376
      %v379 = vshll.u32 %v329, 16
      %v381 = vrot.slane %v379, 1
      %v382 = vsel %vm334, %v377, %v381
      %v384 = vshrl.u32 %v298, 16
      %v386 = vshll.u32 %v298, 16
      %v388 = vrot.slane %v386, 1
      %v389 = vor.u32 %v384, %v388
      %v391 = vshll.u32 %v330, 16
      %v393 = vrot.slane %v391, 1
      %v394 = vsel %vm334, %v389, %v393
      %v396 = vshrl.u32 %v299, 16
      %v398 = vshll.u32 %v299, 16
      %v400 = vrot.slane %v398, 1
      %v401 = vor.u32 %v396, %v400
      %v403 = vshll.u32 %v331, 16
      %v405 = vrot.slane %v403, 1
      %v406 = vsel %vm334, %v401, %v405
      %v408 = vshrl.u32 %v300, 16
      %v410 = vshll.u32 %v300, 16
      %v412 = vrot.slane %v410, 1
      %v413 = vor.u32 %v408, %v412
      %v415 = vshll.u32 %v332, 16
      %v417 = vrot.slane %v415, 1
      %v418 = vsel %vm334, %v413, %v417
      %v420 = vshrl.u32 %v301, 16
      %v422 = vshll.u32 %v301, 16
      %v424 = vrot.slane %v422, 1
      %v425 = vor.u32 %v420, %v424
      %v427 = vshll.u32 %v333, 16
      %v429 = vrot.slane %v427, 1
      %v430 = vsel %vm334, %v425, %v429
      %vm439 = vcmask 1046528
      %v440 = vrot.slane %v294, 1
      %v441 = vrot.slane %v326, 1
      %v442 = vsel %vm439, %v440, %v441
      %v443 = vrot.slane %v295, 1
      %v444 = vrot.slane %v327, 1
      %v445 = vsel %vm439, %v443, %v444
      %v446 = vrot.slane %v296, 1
      %v447 = vrot.slane %v328, 1
      %v448 = vsel %vm439, %v446, %v447
      %v449 = vrot.slane %v297, 1
      %v450 = vrot.slane %v329, 1
      %v451 = vsel %vm439, %v449, %v450
      %v452 = vrot.slane %v298, 1
      %v453 = vrot.slane %v330, 1
      %v454 = vsel %vm439, %v452, %v453
      %v455 = vrot.slane %v299, 1
      %v456 = vrot.slane %v331, 1
      %v457 = vsel %vm439, %v455, %v456
      %v458 = vrot.slane %v300, 1
      %v459 = vrot.slane %v332, 1
      %v460 = vsel %vm439, %v458, %v459
      %v461 = vrot.slane %v301, 1
      %v462 = vrot.slane %v333, 1
      %v463 = vsel %vm439, %v461, %v462
      %v474 = vunpack.c.l.b16 %v256
      %v475 = vunpack.c.l.b16 %v257
      %v476 = vpack.c.b16 %v475, %v474
      %v479 = vunpack.c.l.b16 %v258
      %v480 = vpack.c.b16 %v479, %v479
      %v482 = vshrl.u32 %v476, 16
      %v484 = vshll.u32 %v476, 16
      %v486 = vrot.slane %v484, 1
      %v487 = vor.u32 %v482, %v486
      %v489 = vshll.u32 %v480, 16
      %v491 = vrot.slane %v489, 1
      %v492 = vsel %vm334, %v487, %v491
      %v494 = vrot.slane %v476, 1
      %v495 = vrot.slane %v480, 1
      %v496 = vsel %vm439, %v494, %v495
      %v500 = vunpack.c.l.b16 %v259
      %v501 = vunpack.c.l.b16 %v260
      %v502 = vpack.c.b16 %v501, %v500
      %v505 = vunpack.c.l.b16 %v261
      %v506 = vpack.c.b16 %v505, %v505
      %v508 = vshrl.u32 %v502, 16
      %v510 = vshll.u32 %v502, 16
      %v512 = vrot.slane %v510, 1
      %v513 = vor.u32 %v508, %v512
      %v515 = vshll.u32 %v506, 16
      %v517 = vrot.slane %v515, 1
      %v518 = vsel %vm334, %v513, %v517
      %v520 = vrot.slane %v502, 1
      %v521 = vrot.slane %v506, 1
      %v522 = vsel %vm439, %v520, %v521
      %v524 = vld [vmem:[%s1] sm:$0xf]
      %v525 = vld [vmem:[%s1 + $0x4] sm:$0xf]
      %v526 = vld [vmem:[%s1 + $0x8] sm:$0xf]
      %v527 = vld [vmem:[%s1 + $0xc] sm:$0xf]
      %v528 = vld [vmem:[%s1 + $0x10] sm:$0xf]
      %v529 = vld [vmem:[%s1 + $0x14] sm:$0xf]
      %v530 = vld [vmem:[%s1 + $0x18] sm:$0xf]
      %v531 = vld [vmem:[%s1 + $0x1c] sm:$0xf]
      %v532 = vld [vmem:[%s1 + $0x20] sm:$0xf]
      %v533 = vld [vmem:[%s1 + $0x24] sm:$0xf]
      %v534 = vld [vmem:[%s1 + $0x28] sm:$0xf]
      %v535 = vld [vmem:[%s1 + $0x2c] sm:$0xf]
      %v536 = vld [vmem:[%s1 + $0x30] sm:$0xf]
      %v537 = vld [vmem:[%s1 + $0x34] sm:$0xf]
      %v538 = vld [vmem:[%s1 + $0x38] sm:$0xf]
      %v539 = vld [vmem:[%s1 + $0x3c] sm:$0xf]
      %v540 = vld [vmem:[%s1 + $0x40] sm:$0xf]
      %v541 = vld [vmem:[%s1 + $0x44] sm:$0xf]
      %v542 = vld [vmem:[%s1 + $0x48] sm:$0xf]
      %v543 = vld [vmem:[%s1 + $0x4c] sm:$0xf]
      %v544 = vld [vmem:[%s1 + $0x50] sm:$0xf]
      %v545 = vld [vmem:[%s1 + $0x54] sm:$0xf]
      %v546 = vld [vmem:[%s1 + $0x58] sm:$0xf]
      %v547 = vld [vmem:[%s1 + $0x5c] sm:$0xf]
      %v548 = vld [vmem:[%s1 + $0x60] sm:$0xf]
      %v549 = vld [vmem:[%s1 + $0x64] sm:$0xf]
      %v550 = vld [vmem:[%s1 + $0x68] sm:$0xf]
      %v551 = vld [vmem:[%s1 + $0x6c] sm:$0xf]
      %v552 = vld [vmem:[%s1 + $0x70] sm:$0xf]
      %v553 = vld [vmem:[%s1 + $0x74] sm:$0xf]
      %v554 = vld [vmem:[%s1 + $0x78] sm:$0xf]
      %v555 = vld [vmem:[%s1 + $0x7c] sm:$0xf]
      %v556 = vld [vmem:[%s1 + $0x80] sm:$0xf]
      %v557 = vld [vmem:[%s1 + $0x84] sm:$0xf]
      %v558 = vld [vmem:[%s1 + $0x88] sm:$0xf]
      %v559 = vld [vmem:[%s1 + $0x8c] sm:$0xf]
      %v560 = vld [vmem:[%s1 + $0x90] sm:$0xf]
      %v561 = vld [vmem:[%s1 + $0x94] sm:$0xf]
      %v562 = vld [vmem:[%s1 + $0x98] sm:$0xf]
      %v563 = vld [vmem:[%s1 + $0x9c] sm:$0xf]
      %v564 = vld [vmem:[%s1 + $0xa0] sm:$0xf]
      %v565 = vld [vmem:[%s1 + $0xa4] sm:$0xf]
      %v566 = vld [vmem:[%s1 + $0xa8] sm:$0xf]
      %v567 = vld [vmem:[%s1 + $0xac] sm:$0xf]
      %v568 = vld [vmem:[%s1 + $0xb0] sm:$0xf]
      %v569 = vld [vmem:[%s1 + $0xb4] sm:$0xf]
      %v570 = vld [vmem:[%s1 + $0xb8] sm:$0xf]
      %v571 = vld [vmem:[%s1 + $0xbc] sm:$0xf]
      %v572 = vld [vmem:[%s1 + $0xc0] sm:$0xf]
      %v573 = vld [vmem:[%s1 + $0xc4] sm:$0xf]
      %v574 = vld [vmem:[%s1 + $0xc8] sm:$0xf]
      %v575 = vld [vmem:[%s1 + $0xcc] sm:$0xf]
      %v576 = vld [vmem:[%s1 + $0xd0] sm:$0xf]
      %v577 = vld [vmem:[%s1 + $0xd4] sm:$0xf]
      %v578 = vld [vmem:[%s1 + $0xd8] sm:$0xf]
      %v579 = vld [vmem:[%s1 + $0xdc] sm:$0xf]
      %v580 = vld [vmem:[%s1 + $0xe0] sm:$0xf]
      %v581 = vld [vmem:[%s1 + $0xe4] sm:$0xf]
      %v582 = vld [vmem:[%s1 + $0xe8] sm:$0xf]
      %v583 = vld [vmem:[%s1 + $0xec] sm:$0xf]
      %v584 = vld [vmem:[%s1 + $0xf0] sm:$0xf]
      %v585 = vld [vmem:[%s1 + $0xf4] sm:$0xf]
      %v586 = vld [vmem:[%s1 + $0xf8] sm:$0xf]
      %v587 = vld [vmem:[%s1 + $0xfc] sm:$0xf]
      %v588 = vld [vmem:[%s1 + $0x100] sm:$0xf]
      %v589 = vld [vmem:[%s1 + $0x104] sm:$0xf]
      %v590 = vld [vmem:[%s1 + $0x108] sm:$0xf]
      %v591 = vld [vmem:[%s1 + $0x10c] sm:$0xf]
      %v592 = vld [vmem:[%s1 + $0x110] sm:$0xf]
      %v593 = vld [vmem:[%s1 + $0x114] sm:$0xf]
      %v594 = vld [vmem:[%s1 + $0x118] sm:$0xf]
      %v595 = vld [vmem:[%s1 + $0x11c] sm:$0xf]
      %v596 = vld [vmem:[%s1 + $0x120] sm:$0xf]
      %v597 = vld [vmem:[%s1 + $0x124] sm:$0xf]
      %v598 = vld [vmem:[%s1 + $0x128] sm:$0xf]
      %v599 = vld [vmem:[%s1 + $0x12c] sm:$0xf]
      %v600 = vld [vmem:[%s1 + $0x130] sm:$0xf]
      %v601 = vld [vmem:[%s1 + $0x134] sm:$0xf]
      %v602 = vld [vmem:[%s1 + $0x138] sm:$0xf]
      %v603 = vld [vmem:[%s1 + $0x13c] sm:$0xf]
      %v604 = vld [vmem:[%s1 + $0x140] sm:$0xf]
      %v605 = vld [vmem:[%s1 + $0x144] sm:$0xf]
      %v606 = vld [vmem:[%s1 + $0x148] sm:$0xf]
      %v607 = vld [vmem:[%s1 + $0x14c] sm:$0xf]
      %v608 = vld [vmem:[%s1 + $0x150] sm:$0xf]
      %v609 = vld [vmem:[%s1 + $0x154] sm:$0xf]
      %v610 = vld [vmem:[%s1 + $0x158] sm:$0xf]
      %v611 = vld [vmem:[%s1 + $0x15c] sm:$0xf]
      %v612 = vld [vmem:[%s1 + $0x160] sm:$0xf]
      %v613 = vld [vmem:[%s1 + $0x164] sm:$0xf]
      %v614 = vld [vmem:[%s1 + $0x168] sm:$0xf]
      %v615 = vld [vmem:[%s1 + $0x16c] sm:$0xf]
      %v616 = vld [vmem:[%s1 + $0x170] sm:$0xf]
      %v617 = vld [vmem:[%s1 + $0x174] sm:$0xf]
      %v618 = vld [vmem:[%s1 + $0x178] sm:$0xf]
      %v619 = vld [vmem:[%s1 + $0x17c] sm:$0xf]
      %v620 = vld [vmem:[%s1 + $0x180] sm:$0xf]
      %v621 = vld [vmem:[%s1 + $0x184] sm:$0xf]
      %v622 = vld [vmem:[%s1 + $0x188] sm:$0xf]
      %v623 = vld [vmem:[%s1 + $0x18c] sm:$0xf]
      %v624 = vld [vmem:[%s1 + $0x190] sm:$0xf]
      %v625 = vld [vmem:[%s1 + $0x194] sm:$0xf]
      %v626 = vld [vmem:[%s1 + $0x198] sm:$0xf]
      %v627 = vld [vmem:[%s1 + $0x19c] sm:$0xf]
      %v628 = vld [vmem:[%s1 + $0x1a0] sm:$0xf]
      %v629 = vld [vmem:[%s1 + $0x1a4] sm:$0xf]
      %v630 = vld [vmem:[%s1 + $0x1a8] sm:$0xf]
      %v631 = vld [vmem:[%s1 + $0x1ac] sm:$0xf]
      %v632 = vld [vmem:[%s1 + $0x1b0] sm:$0xf]
      %v633 = vld [vmem:[%s1 + $0x1b4] sm:$0xf]
      %v634 = vld [vmem:[%s1 + $0x1b8] sm:$0xf]
      %v635 = vld [vmem:[%s1 + $0x1bc] sm:$0xf]
      %v636 = vld [vmem:[%s1 + $0x1c0] sm:$0xf]
      %v637 = vld [vmem:[%s1 + $0x1c4] sm:$0xf]
      %v638 = vld [vmem:[%s1 + $0x1c8] sm:$0xf]
      %v639 = vld [vmem:[%s1 + $0x1cc] sm:$0xf]
      %v640 = vld [vmem:[%s1 + $0x1d0] sm:$0xf]
      %v641 = vld [vmem:[%s1 + $0x1d4] sm:$0xf]
      %v642 = vld [vmem:[%s1 + $0x1d8] sm:$0xf]
      %v643 = vld [vmem:[%s1 + $0x1dc] sm:$0xf]
      %v644 = vld [vmem:[%s1 + $0x1e0] sm:$0xf]
      %v645 = vld [vmem:[%s1 + $0x1e4] sm:$0xf]
      %v646 = vld [vmem:[%s1 + $0x1e8] sm:$0xf]
      %v647 = vld [vmem:[%s1 + $0x1ec] sm:$0xf]
      %v648 = vld [vmem:[%s1 + $0x1f0] sm:$0xf]
      %v649 = vld [vmem:[%s1 + $0x1f4] sm:$0xf]
      %v650 = vld [vmem:[%s1 + $0x1f8] sm:$0xf]
      %v651 = vld [vmem:[%s1 + $0x1fc] sm:$0xf]
      %v652 = vld [vmem:[%s1 + $0x200] sm:$0xf]
      %v653 = vld [vmem:[%s1 + $0x204] sm:$0xf]
      %v654 = vld [vmem:[%s1 + $0x208] sm:$0xf]
      %v655 = vld [vmem:[%s1 + $0x20c] sm:$0xf]
      %v656 = vld [vmem:[%s1 + $0x210] sm:$0xf]
      %v657 = vld [vmem:[%s1 + $0x214] sm:$0xf]
      %v658 = vld [vmem:[%s1 + $0x218] sm:$0xf]
      %v659 = vld [vmem:[%s1 + $0x21c] sm:$0xf]
      %v660 = vld [vmem:[%s1 + $0x220] sm:$0xf]
      %v661 = vld [vmem:[%s1 + $0x224] sm:$0xf]
      %v662 = vld [vmem:[%s1 + $0x228] sm:$0xf]
      %v663 = vld [vmem:[%s1 + $0x22c] sm:$0xf]
      %v664 = vld [vmem:[%s1 + $0x230] sm:$0xf]
      %v665 = vld [vmem:[%s1 + $0x234] sm:$0xf]
      %v666 = vld [vmem:[%s1 + $0x238] sm:$0xf]
      %v667 = vld [vmem:[%s1 + $0x23c] sm:$0xf]
      %v812 = vunpack.c.l.b16 %v524
      %v813 = vunpack.c.l.b16 %v525
      %v814 = vunpack.c.l.b16 %v526
      %v815 = vunpack.c.l.b16 %v527
      %v816 = vunpack.c.l.b16 %v528
      %v817 = vunpack.c.l.b16 %v529
      %v818 = vunpack.c.l.b16 %v530
      %v819 = vunpack.c.l.b16 %v531
      %v820 = vunpack.c.l.b16 %v532
      %v821 = vunpack.c.l.b16 %v533
      %v822 = vunpack.c.l.b16 %v534
      %v823 = vunpack.c.l.b16 %v535
      %v824 = vunpack.c.l.b16 %v536
      %v825 = vunpack.c.l.b16 %v537
      %v826 = vunpack.c.l.b16 %v538
      %v827 = vunpack.c.l.b16 %v539
      %v828 = vunpack.c.l.b16 %v540
      %v829 = vunpack.c.l.b16 %v541
      %v830 = vunpack.c.l.b16 %v542
      %v831 = vunpack.c.l.b16 %v543
      %v832 = vunpack.c.l.b16 %v544
      %v833 = vunpack.c.l.b16 %v545
      %v834 = vunpack.c.l.b16 %v546
      %v835 = vunpack.c.l.b16 %v547
      %v836 = vunpack.c.l.b16 %v548
      %v837 = vunpack.c.l.b16 %v549
      %v838 = vunpack.c.l.b16 %v550
      %v839 = vunpack.c.l.b16 %v551
      %v840 = vunpack.c.l.b16 %v552
      %v841 = vunpack.c.l.b16 %v553
      %v842 = vunpack.c.l.b16 %v554
      %v843 = vunpack.c.l.b16 %v555
      %v844 = vunpack.c.l.b16 %v556
      %v845 = vunpack.c.l.b16 %v557
      %v846 = vunpack.c.l.b16 %v558
      %v847 = vunpack.c.l.b16 %v559
      %v848 = vunpack.c.l.b16 %v560
      %v849 = vunpack.c.l.b16 %v561
      %v850 = vunpack.c.l.b16 %v562
      %v851 = vunpack.c.l.b16 %v563
      %v852 = vunpack.c.l.b16 %v564
      %v853 = vunpack.c.l.b16 %v565
      %v854 = vunpack.c.l.b16 %v566
      %v855 = vunpack.c.l.b16 %v567
      %v856 = vunpack.c.l.b16 %v568
      %v857 = vunpack.c.l.b16 %v569
      %v858 = vunpack.c.l.b16 %v570
      %v859 = vunpack.c.l.b16 %v571
      %v860 = vunpack.c.l.b16 %v572
      %v861 = vunpack.c.l.b16 %v573
      %v862 = vunpack.c.l.b16 %v574
      %v863 = vunpack.c.l.b16 %v575
      %v864 = vunpack.c.l.b16 %v576
      %v865 = vunpack.c.l.b16 %v577
      %v866 = vunpack.c.l.b16 %v578
      %v867 = vunpack.c.l.b16 %v579
      %v868 = vunpack.c.l.b16 %v580
      %v869 = vunpack.c.l.b16 %v581
      %v870 = vunpack.c.l.b16 %v582
      %v871 = vunpack.c.l.b16 %v583
      %v872 = vunpack.c.l.b16 %v584
      %v873 = vunpack.c.l.b16 %v585
      %v874 = vunpack.c.l.b16 %v586
      %v875 = vunpack.c.l.b16 %v587
      %v876 = vunpack.c.l.b16 %v588
      %v877 = vunpack.c.l.b16 %v589
      %v878 = vunpack.c.l.b16 %v590
      %v879 = vunpack.c.l.b16 %v591
      %v880 = vunpack.c.l.b16 %v592
      %v881 = vunpack.c.l.b16 %v593
      %v882 = vunpack.c.l.b16 %v594
      %v883 = vunpack.c.l.b16 %v595
      %v884 = vunpack.c.l.b16 %v596
      %v885 = vunpack.c.l.b16 %v597
      %v886 = vunpack.c.l.b16 %v598
      %v887 = vunpack.c.l.b16 %v599
      %v888 = vunpack.c.l.b16 %v600
      %v889 = vunpack.c.l.b16 %v601
      %v890 = vunpack.c.l.b16 %v602
      %v891 = vunpack.c.l.b16 %v603
      %v892 = vunpack.c.l.b16 %v604
      %v893 = vunpack.c.l.b16 %v605
      %v894 = vunpack.c.l.b16 %v606
      %v895 = vunpack.c.l.b16 %v607
      %v896 = vunpack.c.l.b16 %v608
      %v897 = vunpack.c.l.b16 %v609
      %v898 = vunpack.c.l.b16 %v610
      %v899 = vunpack.c.l.b16 %v611
      %v900 = vunpack.c.l.b16 %v612
      %v901 = vunpack.c.l.b16 %v613
      %v902 = vunpack.c.l.b16 %v614
      %v903 = vunpack.c.l.b16 %v615
      %v904 = vunpack.c.l.b16 %v616
      %v905 = vunpack.c.l.b16 %v617
      %v906 = vunpack.c.l.b16 %v618
      %v907 = vunpack.c.l.b16 %v619
      %v908 = vunpack.c.l.b16 %v620
      %v909 = vunpack.c.l.b16 %v621
      %v910 = vunpack.c.l.b16 %v622
      %v911 = vunpack.c.l.b16 %v623
      %v912 = vunpack.c.l.b16 %v624
      %v913 = vunpack.c.l.b16 %v625
      %v914 = vunpack.c.l.b16 %v626
      %v915 = vunpack.c.l.b16 %v627
      %v916 = vunpack.c.l.b16 %v628
      %v917 = vunpack.c.l.b16 %v629
      %v918 = vunpack.c.l.b16 %v630
      %v919 = vunpack.c.l.b16 %v631
      %v920 = vunpack.c.l.b16 %v632
      %v921 = vunpack.c.l.b16 %v633
      %v922 = vunpack.c.l.b16 %v634
      %v923 = vunpack.c.l.b16 %v635
      %v924 = vunpack.c.l.b16 %v636
      %v925 = vunpack.c.l.b16 %v637
      %v926 = vunpack.c.l.b16 %v638
      %v927 = vunpack.c.l.b16 %v639
      %v928 = vunpack.c.l.b16 %v640
      %v929 = vunpack.c.l.b16 %v641
      %v930 = vunpack.c.l.b16 %v642
      %v931 = vunpack.c.l.b16 %v643
      %v932 = vunpack.c.l.b16 %v644
      %v933 = vunpack.c.l.b16 %v645
      %v934 = vunpack.c.l.b16 %v646
      %v935 = vunpack.c.l.b16 %v647
      %v936 = vunpack.c.l.b16 %v648
      %v937 = vunpack.c.l.b16 %v649
      %v938 = vunpack.c.l.b16 %v650
      %v939 = vunpack.c.l.b16 %v651
      %v940 = vunpack.c.l.b16 %v652
      %v941 = vunpack.c.l.b16 %v653
      %v942 = vunpack.c.l.b16 %v654
      %v943 = vunpack.c.l.b16 %v655
      %v944 = vunpack.c.l.b16 %v656
      %v945 = vunpack.c.l.b16 %v657
      %v946 = vunpack.c.l.b16 %v658
      %v947 = vunpack.c.l.b16 %v659
      %v948 = vunpack.c.l.b16 %v660
      %v949 = vunpack.c.l.b16 %v661
      %v950 = vunpack.c.l.b16 %v662
      %v951 = vunpack.c.l.b16 %v663
      %v952 = vunpack.c.l.b16 %v664
      %v953 = vunpack.c.l.b16 %v665
      %v954 = vunpack.c.l.b16 %v666
      %v955 = vunpack.c.l.b16 %v667
      %v956 = vpack.c.b16 %v813, %v812
      %v957 = vpack.c.b16 %v815, %v814
      %v958 = vpack.c.b16 %v817, %v816
      %v959 = vpack.c.b16 %v819, %v818
      %v960 = vpack.c.b16 %v821, %v820
      %v961 = vpack.c.b16 %v823, %v822
      %v962 = vpack.c.b16 %v825, %v824
      %v963 = vpack.c.b16 %v827, %v826
      %v964 = vpack.c.b16 %v829, %v828
      %v965 = vpack.c.b16 %v831, %v830
      %v966 = vpack.c.b16 %v833, %v832
      %v967 = vpack.c.b16 %v835, %v834
      %v968 = vpack.c.b16 %v837, %v836
      %v969 = vpack.c.b16 %v839, %v838
      %v970 = vpack.c.b16 %v841, %v840
      %v971 = vpack.c.b16 %v843, %v842
      %v972 = vpack.c.b16 %v845, %v844
      %v973 = vpack.c.b16 %v847, %v846
      %v974 = vpack.c.b16 %v849, %v848
      %v975 = vpack.c.b16 %v851, %v850
      %v976 = vpack.c.b16 %v853, %v852
      %v977 = vpack.c.b16 %v855, %v854
      %v978 = vpack.c.b16 %v857, %v856
      %v979 = vpack.c.b16 %v859, %v858
      %v980 = vpack.c.b16 %v861, %v860
      %v981 = vpack.c.b16 %v863, %v862
      %v982 = vpack.c.b16 %v865, %v864
      %v983 = vpack.c.b16 %v867, %v866
      %v984 = vpack.c.b16 %v869, %v868
      %v985 = vpack.c.b16 %v871, %v870
      %v986 = vpack.c.b16 %v873, %v872
      %v987 = vpack.c.b16 %v875, %v874
      %v988 = vpack.c.b16 %v877, %v876
      %v989 = vpack.c.b16 %v879, %v878
      %v990 = vpack.c.b16 %v881, %v880
      %v991 = vpack.c.b16 %v883, %v882
      %v992 = vpack.c.b16 %v885, %v884
      %v993 = vpack.c.b16 %v887, %v886
      %v994 = vpack.c.b16 %v889, %v888
      %v995 = vpack.c.b16 %v891, %v890
      %v996 = vpack.c.b16 %v893, %v892
      %v997 = vpack.c.b16 %v895, %v894
      %v998 = vpack.c.b16 %v897, %v896
      %v999 = vpack.c.b16 %v899, %v898
      %v1000 = vpack.c.b16 %v901, %v900
      %v1001 = vpack.c.b16 %v903, %v902
      %v1002 = vpack.c.b16 %v905, %v904
      %v1003 = vpack.c.b16 %v907, %v906
      %v1004 = vpack.c.b16 %v909, %v908
      %v1005 = vpack.c.b16 %v911, %v910
      %v1006 = vpack.c.b16 %v913, %v912
      %v1007 = vpack.c.b16 %v915, %v914
      %v1008 = vpack.c.b16 %v917, %v916
      %v1009 = vpack.c.b16 %v919, %v918
      %v1010 = vpack.c.b16 %v921, %v920
      %v1011 = vpack.c.b16 %v923, %v922
      %v1012 = vpack.c.b16 %v925, %v924
      %v1013 = vpack.c.b16 %v927, %v926
      %v1014 = vpack.c.b16 %v929, %v928
      %v1015 = vpack.c.b16 %v931, %v930
      %v1016 = vpack.c.b16 %v933, %v932
      %v1017 = vpack.c.b16 %v935, %v934
      %v1018 = vpack.c.b16 %v937, %v936
      %v1019 = vpack.c.b16 %v939, %v938
      %v1020 = vpack.c.b16 %v941, %v940
      %v1021 = vpack.c.b16 %v943, %v942
      %v1022 = vpack.c.b16 %v945, %v944
      %v1023 = vpack.c.b16 %v947, %v946
      %v1024 = vpack.c.b16 %v949, %v948
      %v1025 = vpack.c.b16 %v951, %v950
      %v1026 = vpack.c.b16 %v953, %v952
      %v1027 = vpack.c.b16 %v955, %v954
      %1100 = vmatprep.subr.bf16.mxu0 0
      %1101 = vmatpush1.bf16.msra.mxu0 %v956
      %1102 = vmatprep.subr.bf16.mxu0 0
      %1103 = vmatpush1.bf16.msra.mxu0 %v957
      %1104 = vmatprep.subr.bf16.mxu0 0
      %1105 = vmatpush1.bf16.msra.mxu0 %v958
      %1106 = vmatprep.subr.bf16.mxu0 0
      %1107 = vmatpush1.bf16.msra.mxu0 %v959
      %1108 = vmatprep.subr.bf16.mxu0 0
      %1109 = vmatpush1.bf16.msra.mxu0 %v960
      %1110 = vmatprep.subr.bf16.mxu0 0
      %1111 = vmatpush1.bf16.msra.mxu0 %v961
      %1112 = vmatprep.subr.bf16.mxu0 0
      %1113 = vmatpush1.bf16.msra.mxu0 %v962
      %1114 = vmatprep.subr.bf16.mxu0 0
      %1115 = vmatpush1.bf16.msra.mxu0 %v963
      %1116 = vmatprep.subr.bf16.mxu0 0
      %1117 = vmatpush1.bf16.msra.mxu0 %v964
      %1118 = vmatprep.subr.bf16.mxu0 0
      %1119 = vmatpush1.bf16.msra.mxu0 %v965
      %1120 = vmatprep.subr.bf16.mxu0 0
      %1121 = vmatpush1.bf16.msra.mxu0 %v966
      %1122 = vmatprep.subr.bf16.mxu0 0
      %1123 = vmatpush1.bf16.msra.mxu0 %v967
      %1124 = vmatprep.subr.bf16.mxu0 0
      %1125 = vmatpush1.bf16.msra.mxu0 %v968
      %1126 = vmatprep.subr.bf16.mxu0 0
      %1127 = vmatpush1.bf16.msra.mxu0 %v969
      %1128 = vmatprep.subr.bf16.mxu0 0
      %1129 = vmatpush1.bf16.msra.mxu0 %v970
      %1130 = vmatprep.subr.bf16.mxu0 0
      %1131 = vmatpush1.bf16.msra.mxu0 %v971
      %1132 = vmatprep.mubr.bf16.mxu0 %v346
      %1133 = vmatmul.mubr.bf16.gmra.mrb[0].mxu0 %v294
      %v1134 = vpop.f32.mrb[0].mxu0
      %v1135 = vadd.f32 0.0, %v1134
      %v1136 = vpop.f32.mrb[0].mxu0
      %v1137 = vpop.f32.mrb[0].mxu0
      %v1138 = vadd.f32 0.0, %v1137
      %v1139 = vpop.f32.mrb[0].mxu0
      %1140 = vmatprep.mubr.bf16.mxu0 %v358
      %1141 = vmatmul.mubr.bf16.gmra.mrb[0].mxu0 %v295
      %v1142 = vpop.f32.mrb[0].mxu0
      %v1143 = vadd.f32 0.0, %v1142
      %v1144 = vpop.f32.mrb[0].mxu0
      %v1145 = vpop.f32.mrb[0].mxu0
      %v1146 = vadd.f32 0.0, %v1145
      %v1147 = vpop.f32.mrb[0].mxu0
      %1148 = vmatprep.mubr.bf16.mxu0 %v370
      %1149 = vmatmul.mubr.bf16.gmra.mrb[0].mxu0 %v296
      %v1150 = vpop.f32.mrb[0].mxu0
      %v1151 = vadd.f32 0.0, %v1150
      %v1152 = vpop.f32.mrb[0].mxu0
      %v1153 = vpop.f32.mrb[0].mxu0
      %v1154 = vadd.f32 0.0, %v1153
      %v1155 = vpop.f32.mrb[0].mxu0
      %1156 = vmatprep.mubr.bf16.mxu0 %v382
      %1157 = vmatmul.mubr.bf16.gmra.mrb[0].mxu0 %v297
      %v1158 = vpop.f32.mrb[0].mxu0
      %v1159 = vadd.f32 0.0, %v1158
      %v1160 = vpop.f32.mrb[0].mxu0
      %v1161 = vpop.f32.mrb[0].mxu0
      %v1162 = vadd.f32 0.0, %v1161
      %v1163 = vpop.f32.mrb[0].mxu0
      %1164 = vmatprep.mubr.bf16.mxu0 %v394
      %1165 = vmatmul.mubr.bf16.gmra.mrb[0].mxu0 %v298
      %v1166 = vpop.f32.mrb[0].mxu0
      %v1167 = vadd.f32 0.0, %v1166
      %v1168 = vpop.f32.mrb[0].mxu0
      %v1169 = vpop.f32.mrb[0].mxu0
      %v1170 = vadd.f32 0.0, %v1169
      %v1171 = vpop.f32.mrb[0].mxu0
      %1172 = vmatprep.mubr.bf16.mxu0 %v406
      %1173 = vmatmul.mubr.bf16.gmra.mrb[0].mxu0 %v299
      %v1174 = vpop.f32.mrb[0].mxu0
      %v1175 = vadd.f32 0.0, %v1174
      %v1176 = vpop.f32.mrb[0].mxu0
      %v1177 = vpop.f32.mrb[0].mxu0
      %v1178 = vadd.f32 0.0, %v1177
      %v1179 = vpop.f32.mrb[0].mxu0
      %1180 = vmatprep.mubr.bf16.mxu0 %v418
      %1181 = vmatmul.mubr.bf16.gmra.mrb[0].mxu0 %v300
      %v1182 = vpop.f32.mrb[0].mxu0
      %v1183 = vadd.f32 0.0, %v1182
      %v1184 = vpop.f32.mrb[0].mxu0
      %v1185 = vpop.f32.mrb[0].mxu0
      %v1186 = vadd.f32 0.0, %v1185
      %v1187 = vpop.f32.mrb[0].mxu0
      %1188 = vmatprep.mubr.bf16.mxu0 %v430
      %1189 = vmatmul.mubr.bf16.gmra.mrb[0].mxu0 %v301
      %v1190 = vpop.f32.mrb[0].mxu0
      %v1191 = vadd.f32 0.0, %v1190
      %v1192 = vpop.f32.mrb[0].mxu0
      %v1193 = vpop.f32.mrb[0].mxu0
      %v1194 = vadd.f32 0.0, %v1193
      %v1195 = vpop.f32.mrb[0].mxu0
      %1196 = vdwg.mxu0
      %1197 = vmatprep.subr.bf16.mxu0 0
      %1198 = vmatpush1.bf16.msra.mxu0 %v972
      %1199 = vmatprep.subr.bf16.mxu0 0
      %1200 = vmatpush1.bf16.msra.mxu0 %v973
      %1201 = vmatprep.subr.bf16.mxu0 0
      %1202 = vmatpush1.bf16.msra.mxu0 %v974
      %1203 = vmatprep.subr.bf16.mxu0 0
      %1204 = vmatpush1.bf16.msra.mxu0 %v975
      %1205 = vmatprep.subr.bf16.mxu0 0
      %1206 = vmatpush1.bf16.msra.mxu0 %v976
      %1207 = vmatprep.subr.bf16.mxu0 0
      %1208 = vmatpush1.bf16.msra.mxu0 %v977
      %1209 = vmatprep.subr.bf16.mxu0 0
      %1210 = vmatpush1.bf16.msra.mxu0 %v978
      %1211 = vmatprep.subr.bf16.mxu0 0
      %1212 = vmatpush1.bf16.msra.mxu0 %v979
      %1213 = vmatprep.subr.bf16.mxu0 0
      %1214 = vmatpush1.bf16.msra.mxu0 %v980
      %1215 = vmatprep.subr.bf16.mxu0 0
      %1216 = vmatpush1.bf16.msra.mxu0 %v981
      %1217 = vmatprep.subr.bf16.mxu0 0
      %1218 = vmatpush1.bf16.msra.mxu0 %v982
      %1219 = vmatprep.subr.bf16.mxu0 0
      %1220 = vmatpush1.bf16.msra.mxu0 %v983
      %1221 = vmatprep.subr.bf16.mxu0 0
      %1222 = vmatpush1.bf16.msra.mxu0 %v984
      %1223 = vmatprep.subr.bf16.mxu0 0
      %1224 = vmatpush1.bf16.msra.mxu0 %v985
      %1225 = vmatprep.subr.bf16.mxu0 0
      %1226 = vmatpush1.bf16.msra.mxu0 %v986
      %1227 = vmatprep.subr.bf16.mxu0 0
      %1228 = vmatpush1.bf16.msra.mxu0 %v987
      %1229 = vmatprep.mubr.bf16.mxu0 %v295
      %1230 = vmatmul.mubr.bf16.gmra.mrb[0].mxu0 %v442
      %v1231 = vpop.f32.mrb[0].mxu0
      %v1232 = vadd.f32 %v1135, %v1231
      %v1233 = vpop.f32.mrb[0].mxu0
      %v1234 = vpop.f32.mrb[0].mxu0
      %v1235 = vadd.f32 %v1138, %v1234
      %v1236 = vpop.f32.mrb[0].mxu0
      %1237 = vmatprep.mubr.bf16.mxu0 %v296
      %1238 = vmatmul.mubr.bf16.gmra.mrb[0].mxu0 %v445
      %v1239 = vpop.f32.mrb[0].mxu0
      %v1240 = vadd.f32 %v1143, %v1239
      %v1241 = vpop.f32.mrb[0].mxu0
      %v1242 = vpop.f32.mrb[0].mxu0
      %v1243 = vadd.f32 %v1146, %v1242
      %v1244 = vpop.f32.mrb[0].mxu0
      %1245 = vmatprep.mubr.bf16.mxu0 %v297
      %1246 = vmatmul.mubr.bf16.gmra.mrb[0].mxu0 %v448
      %v1247 = vpop.f32.mrb[0].mxu0
      %v1248 = vadd.f32 %v1151, %v1247
      %v1249 = vpop.f32.mrb[0].mxu0
      %v1250 = vpop.f32.mrb[0].mxu0
      %v1251 = vadd.f32 %v1154, %v1250
      %v1252 = vpop.f32.mrb[0].mxu0
      %1253 = vmatprep.mubr.bf16.mxu0 %v298
      %1254 = vmatmul.mubr.bf16.gmra.mrb[0].mxu0 %v451
      %v1255 = vpop.f32.mrb[0].mxu0
      %v1256 = vadd.f32 %v1159, %v1255
      %v1257 = vpop.f32.mrb[0].mxu0
      %v1258 = vpop.f32.mrb[0].mxu0
      %v1259 = vadd.f32 %v1162, %v1258
      %v1260 = vpop.f32.mrb[0].mxu0
      %1261 = vmatprep.mubr.bf16.mxu0 %v299
      %1262 = vmatmul.mubr.bf16.gmra.mrb[0].mxu0 %v454
      %v1263 = vpop.f32.mrb[0].mxu0
      %v1264 = vadd.f32 %v1167, %v1263
      %v1265 = vpop.f32.mrb[0].mxu0
      %v1266 = vpop.f32.mrb[0].mxu0
      %v1267 = vadd.f32 %v1170, %v1266
      %v1268 = vpop.f32.mrb[0].mxu0
      %1269 = vmatprep.mubr.bf16.mxu0 %v300
      %1270 = vmatmul.mubr.bf16.gmra.mrb[0].mxu0 %v457
      %v1271 = vpop.f32.mrb[0].mxu0
      %v1272 = vadd.f32 %v1175, %v1271
      %v1273 = vpop.f32.mrb[0].mxu0
      %v1274 = vpop.f32.mrb[0].mxu0
      %v1275 = vadd.f32 %v1178, %v1274
      %v1276 = vpop.f32.mrb[0].mxu0
      %1277 = vmatprep.mubr.bf16.mxu0 %v301
      %1278 = vmatmul.mubr.bf16.gmra.mrb[0].mxu0 %v460
      %v1279 = vpop.f32.mrb[0].mxu0
      %v1280 = vadd.f32 %v1183, %v1279
      %v1281 = vpop.f32.mrb[0].mxu0
      %v1282 = vpop.f32.mrb[0].mxu0
      %v1283 = vadd.f32 %v1186, %v1282
      %v1284 = vpop.f32.mrb[0].mxu0
      %1285 = vmatprep.mubr.bf16.mxu0 %v476
      %1286 = vmatmul.mubr.bf16.gmra.mrb[0].mxu0 %v463
      %v1287 = vpop.f32.mrb[0].mxu0
      %v1288 = vadd.f32 %v1191, %v1287
      %v1289 = vpop.f32.mrb[0].mxu0
      %v1290 = vpop.f32.mrb[0].mxu0
      %v1291 = vadd.f32 %v1194, %v1290
      %v1292 = vpop.f32.mrb[0].mxu0
      %1293 = vdwg.mxu0
      %1294 = vmatprep.subr.bf16.mxu0 0
      %1295 = vmatpush1.bf16.msra.mxu0 %v988
      %1296 = vmatprep.subr.bf16.mxu0 0
      %1297 = vmatpush1.bf16.msra.mxu0 %v989
      %1298 = vmatprep.subr.bf16.mxu0 0
      %1299 = vmatpush1.bf16.msra.mxu0 %v990
      %1300 = vmatprep.subr.bf16.mxu0 0
      %1301 = vmatpush1.bf16.msra.mxu0 %v991
      %1302 = vmatprep.subr.bf16.mxu0 0
      %1303 = vmatpush1.bf16.msra.mxu0 %v992
      %1304 = vmatprep.subr.bf16.mxu0 0
      %1305 = vmatpush1.bf16.msra.mxu0 %v993
      %1306 = vmatprep.subr.bf16.mxu0 0
      %1307 = vmatpush1.bf16.msra.mxu0 %v994
      %1308 = vmatprep.subr.bf16.mxu0 0
      %1309 = vmatpush1.bf16.msra.mxu0 %v995
      %1310 = vmatprep.subr.bf16.mxu0 0
      %1311 = vmatpush1.bf16.msra.mxu0 %v996
      %1312 = vmatprep.subr.bf16.mxu0 0
      %1313 = vmatpush1.bf16.msra.mxu0 %v997
      %1314 = vmatprep.subr.bf16.mxu0 0
      %1315 = vmatpush1.bf16.msra.mxu0 %v998
      %1316 = vmatprep.subr.bf16.mxu0 0
      %1317 = vmatpush1.bf16.msra.mxu0 %v999
      %1318 = vmatprep.subr.bf16.mxu0 0
      %1319 = vmatpush1.bf16.msra.mxu0 %v1000
      %1320 = vmatprep.subr.bf16.mxu0 0
      %1321 = vmatpush1.bf16.msra.mxu0 %v1001
      %1322 = vmatprep.subr.bf16.mxu0 0
      %1323 = vmatpush1.bf16.msra.mxu0 %v1002
      %1324 = vmatprep.subr.bf16.mxu0 0
      %1325 = vmatpush1.bf16.msra.mxu0 %v1003
      %1326 = vmatprep.mubr.bf16.mxu0 %v445
      %1327 = vmatmul.mubr.bf16.gmra.mrb[0].mxu0 %v358
      %v1328 = vpop.f32.mrb[0].mxu0
      %v1329 = vadd.f32 %v1232, %v1328
      %v1330 = vpop.f32.mrb[0].mxu0
      %v1331 = vpop.f32.mrb[0].mxu0
      %v1332 = vadd.f32 %v1235, %v1331
      %v1333 = vpop.f32.mrb[0].mxu0
      %1334 = vmatprep.mubr.bf16.mxu0 %v448
      %1335 = vmatmul.mubr.bf16.gmra.mrb[0].mxu0 %v370
      %v1336 = vpop.f32.mrb[0].mxu0
      %v1337 = vadd.f32 %v1240, %v1336
      %v1338 = vpop.f32.mrb[0].mxu0
      %v1339 = vpop.f32.mrb[0].mxu0
      %v1340 = vadd.f32 %v1243, %v1339
      %v1341 = vpop.f32.mrb[0].mxu0
      %1342 = vmatprep.mubr.bf16.mxu0 %v451
      %1343 = vmatmul.mubr.bf16.gmra.mrb[0].mxu0 %v382
      %v1344 = vpop.f32.mrb[0].mxu0
      %v1345 = vadd.f32 %v1248, %v1344
      %v1346 = vpop.f32.mrb[0].mxu0
      %v1347 = vpop.f32.mrb[0].mxu0
      %v1348 = vadd.f32 %v1251, %v1347
      %v1349 = vpop.f32.mrb[0].mxu0
      %1350 = vmatprep.mubr.bf16.mxu0 %v454
      %1351 = vmatmul.mubr.bf16.gmra.mrb[0].mxu0 %v394
      %v1352 = vpop.f32.mrb[0].mxu0
      %v1353 = vadd.f32 %v1256, %v1352
      %v1354 = vpop.f32.mrb[0].mxu0
      %v1355 = vpop.f32.mrb[0].mxu0
      %v1356 = vadd.f32 %v1259, %v1355
      %v1357 = vpop.f32.mrb[0].mxu0
      %1358 = vmatprep.mubr.bf16.mxu0 %v457
      %1359 = vmatmul.mubr.bf16.gmra.mrb[0].mxu0 %v406
      %v1360 = vpop.f32.mrb[0].mxu0
      %v1361 = vadd.f32 %v1264, %v1360
      %v1362 = vpop.f32.mrb[0].mxu0
      %v1363 = vpop.f32.mrb[0].mxu0
      %v1364 = vadd.f32 %v1267, %v1363
      %v1365 = vpop.f32.mrb[0].mxu0
      %1366 = vmatprep.mubr.bf16.mxu0 %v460
      %1367 = vmatmul.mubr.bf16.gmra.mrb[0].mxu0 %v418
      %v1368 = vpop.f32.mrb[0].mxu0
      %v1369 = vadd.f32 %v1272, %v1368
      %v1370 = vpop.f32.mrb[0].mxu0
      %v1371 = vpop.f32.mrb[0].mxu0
      %v1372 = vadd.f32 %v1275, %v1371
      %v1373 = vpop.f32.mrb[0].mxu0
      %1374 = vmatprep.mubr.bf16.mxu0 %v463
      %1375 = vmatmul.mubr.bf16.gmra.mrb[0].mxu0 %v430
      %v1376 = vpop.f32.mrb[0].mxu0
      %v1377 = vadd.f32 %v1280, %v1376
      %v1378 = vpop.f32.mrb[0].mxu0
      %v1379 = vpop.f32.mrb[0].mxu0
      %v1380 = vadd.f32 %v1283, %v1379
      %v1381 = vpop.f32.mrb[0].mxu0
      %1382 = vmatprep.mubr.bf16.mxu0 %v496
      %1383 = vmatmul.mubr.bf16.gmra.mrb[0].mxu0 %v492
      %v1384 = vpop.f32.mrb[0].mxu0
      %v1385 = vadd.f32 %v1288, %v1384
      %v1386 = vpop.f32.mrb[0].mxu0
      %v1387 = vpop.f32.mrb[0].mxu0
      %v1388 = vadd.f32 %v1291, %v1387
      %v1389 = vpop.f32.mrb[0].mxu0
      %1390 = vdwg.mxu0
      %1391 = vmatprep.subr.bf16.mxu0 0
      %1392 = vmatpush1.bf16.msra.mxu0 %v1004
      %1393 = vmatprep.subr.bf16.mxu0 0
      %1394 = vmatpush1.bf16.msra.mxu0 %v1005
      %1395 = vmatprep.subr.bf16.mxu0 0
      %1396 = vmatpush1.bf16.msra.mxu0 %v1006
      %1397 = vmatprep.subr.bf16.mxu0 0
      %1398 = vmatpush1.bf16.msra.mxu0 %v1007
      %1399 = vmatprep.subr.bf16.mxu0 0
      %1400 = vmatpush1.bf16.msra.mxu0 %v1008
      %1401 = vmatprep.subr.bf16.mxu0 0
      %1402 = vmatpush1.bf16.msra.mxu0 %v1009
      %1403 = vmatprep.subr.bf16.mxu0 0
      %1404 = vmatpush1.bf16.msra.mxu0 %v1010
      %1405 = vmatprep.subr.bf16.mxu0 0
      %1406 = vmatpush1.bf16.msra.mxu0 %v1011
      %1407 = vmatprep.subr.bf16.mxu0 0
      %1408 = vmatpush1.bf16.msra.mxu0 %v1012
      %1409 = vmatprep.subr.bf16.mxu0 0
      %1410 = vmatpush1.bf16.msra.mxu0 %v1013
      %1411 = vmatprep.subr.bf16.mxu0 0
      %1412 = vmatpush1.bf16.msra.mxu0 %v1014
      %1413 = vmatprep.subr.bf16.mxu0 0
      %1414 = vmatpush1.bf16.msra.mxu0 %v1015
      %1415 = vmatprep.subr.bf16.mxu0 0
      %1416 = vmatpush1.bf16.msra.mxu0 %v1016
      %1417 = vmatprep.subr.bf16.mxu0 0
      %1418 = vmatpush1.bf16.msra.mxu0 %v1017
      %1419 = vmatprep.subr.bf16.mxu0 0
      %1420 = vmatpush1.bf16.msra.mxu0 %v1018
      %1421 = vmatprep.subr.bf16.mxu0 0
      %1422 = vmatpush1.bf16.msra.mxu0 %v1019
      %1423 = vmatprep.mubr.bf16.mxu0 %v370
      %1424 = vmatmul.mubr.bf16.gmra.mrb[0].mxu0 %v296
      %v1425 = vpop.f32.mrb[0].mxu0
      %v1426 = vadd.f32 %v1329, %v1425
      %v1427 = vpop.f32.mrb[0].mxu0
      %v1428 = vpop.f32.mrb[0].mxu0
      %v1429 = vadd.f32 %v1332, %v1428
      %v1430 = vpop.f32.mrb[0].mxu0
      %1431 = vmatprep.mubr.bf16.mxu0 %v382
      %1432 = vmatmul.mubr.bf16.gmra.mrb[0].mxu0 %v297
      %v1433 = vpop.f32.mrb[0].mxu0
      %v1434 = vadd.f32 %v1337, %v1433
      %v1435 = vpop.f32.mrb[0].mxu0
      %v1436 = vpop.f32.mrb[0].mxu0
      %v1437 = vadd.f32 %v1340, %v1436
      %v1438 = vpop.f32.mrb[0].mxu0
      %1439 = vmatprep.mubr.bf16.mxu0 %v394
      %1440 = vmatmul.mubr.bf16.gmra.mrb[0].mxu0 %v298
      %v1441 = vpop.f32.mrb[0].mxu0
      %v1442 = vadd.f32 %v1345, %v1441
      %v1443 = vpop.f32.mrb[0].mxu0
      %v1444 = vpop.f32.mrb[0].mxu0
      %v1445 = vadd.f32 %v1348, %v1444
      %v1446 = vpop.f32.mrb[0].mxu0
      %1447 = vmatprep.mubr.bf16.mxu0 %v406
      %1448 = vmatmul.mubr.bf16.gmra.mrb[0].mxu0 %v299
      %v1449 = vpop.f32.mrb[0].mxu0
      %v1450 = vadd.f32 %v1353, %v1449
      %v1451 = vpop.f32.mrb[0].mxu0
      %v1452 = vpop.f32.mrb[0].mxu0
      %v1453 = vadd.f32 %v1356, %v1452
      %v1454 = vpop.f32.mrb[0].mxu0
      %1455 = vmatprep.mubr.bf16.mxu0 %v418
      %1456 = vmatmul.mubr.bf16.gmra.mrb[0].mxu0 %v300
      %v1457 = vpop.f32.mrb[0].mxu0
      %v1458 = vadd.f32 %v1361, %v1457
      %v1459 = vpop.f32.mrb[0].mxu0
      %v1460 = vpop.f32.mrb[0].mxu0
      %v1461 = vadd.f32 %v1364, %v1460
      %v1462 = vpop.f32.mrb[0].mxu0
      %1463 = vmatprep.mubr.bf16.mxu0 %v430
      %1464 = vmatmul.mubr.bf16.gmra.mrb[0].mxu0 %v301
      %v1465 = vpop.f32.mrb[0].mxu0
      %v1466 = vadd.f32 %v1369, %v1465
      %v1467 = vpop.f32.mrb[0].mxu0
      %v1468 = vpop.f32.mrb[0].mxu0
      %v1469 = vadd.f32 %v1372, %v1468
      %v1470 = vpop.f32.mrb[0].mxu0
      %1471 = vmatprep.mubr.bf16.mxu0 %v492
      %1472 = vmatmul.mubr.bf16.gmra.mrb[0].mxu0 %v476
      %v1473 = vpop.f32.mrb[0].mxu0
      %v1474 = vadd.f32 %v1377, %v1473
      %v1475 = vpop.f32.mrb[0].mxu0
      %v1476 = vpop.f32.mrb[0].mxu0
      %v1477 = vadd.f32 %v1380, %v1476
      %v1478 = vpop.f32.mrb[0].mxu0
      %1479 = vmatprep.mubr.bf16.mxu0 %v518
      %1480 = vmatmul.mubr.bf16.gmra.mrb[0].mxu0 %v502
      %v1481 = vpop.f32.mrb[0].mxu0
      %v1482 = vadd.f32 %v1385, %v1481
      %v1483 = vpop.f32.mrb[0].mxu0
      %v1484 = vpop.f32.mrb[0].mxu0
      %v1485 = vadd.f32 %v1388, %v1484
      %v1486 = vpop.f32.mrb[0].mxu0
      %1487 = vdwg.mxu0
      %1488 = vmatprep.subr.bf16.mxu0 0
      %1489 = vmatpush1.bf16.msra.mxu0 %v1020
      %1490 = vmatprep.subr.bf16.mxu0 0
      %1491 = vmatpush1.bf16.msra.mxu0 %v1021
      %1492 = vmatprep.subr.bf16.mxu0 0
      %1493 = vmatpush1.bf16.msra.mxu0 %v1022
      %1494 = vmatprep.subr.bf16.mxu0 0
      %1495 = vmatpush1.bf16.msra.mxu0 %v1023
      %1496 = vmatprep.subr.bf16.mxu0 0
      %1497 = vmatpush1.bf16.msra.mxu0 %v1024
      %1498 = vmatprep.subr.bf16.mxu0 0
      %1499 = vmatpush1.bf16.msra.mxu0 %v1025
      %1500 = vmatprep.subr.bf16.mxu0 0
      %1501 = vmatpush1.bf16.msra.mxu0 %v1026
      %1502 = vmatprep.subr.bf16.mxu0 0
      %1503 = vmatpush1.bf16.msra.mxu0 %v1027
      %1504 = vmatprep.subr.bf16.mxu0 0
      %1505 = vmatpush1.bf16.msra.mxu0 0
      %1506 = vmatprep.subr.bf16.mxu0 0
      %1507 = vmatpush1.bf16.msra.mxu0 0
      %1508 = vmatprep.subr.bf16.mxu0 0
      %1509 = vmatpush1.bf16.msra.mxu0 0
      %1510 = vmatprep.subr.bf16.mxu0 0
      %1511 = vmatpush1.bf16.msra.mxu0 0
      %1512 = vmatprep.subr.bf16.mxu0 0
      %1513 = vmatpush1.bf16.msra.mxu0 0
      %1514 = vmatprep.subr.bf16.mxu0 0
      %1515 = vmatpush1.bf16.msra.mxu0 0
      %1516 = vmatprep.subr.bf16.mxu0 0
      %1517 = vmatpush1.bf16.msra.mxu0 0
      %1518 = vmatprep.subr.bf16.mxu0 0
      %1519 = vmatpush1.bf16.msra.mxu0 0
      %1520 = vmatprep.mubr.bf16.mxu0 0
      %1521 = vmatmul.mubr.bf16.gmra.mrb[0].mxu0 %v448
      %v1522 = vpop.f32.mrb[0].mxu0
      %v1523 = vadd.f32 %v1426, %v1522
      %v1524 = vpop.f32.mrb[0].mxu0
      %v1525 = vpop.f32.mrb[0].mxu0
      %v1526 = vadd.f32 %v1429, %v1525
      %v1527 = vpop.f32.mrb[0].mxu0
      %1528 = vmatprep.mubr.bf16.mxu0 0
      %1529 = vmatmul.mubr.bf16.gmra.mrb[0].mxu0 %v451
      %v1530 = vpop.f32.mrb[0].mxu0
      %v1531 = vadd.f32 %v1434, %v1530
      %v1532 = vpop.f32.mrb[0].mxu0
      %v1533 = vpop.f32.mrb[0].mxu0
      %v1534 = vadd.f32 %v1437, %v1533
      %v1535 = vpop.f32.mrb[0].mxu0
      %1536 = vmatprep.mubr.bf16.mxu0 0
      %1537 = vmatmul.mubr.bf16.gmra.mrb[0].mxu0 %v454
      %v1538 = vpop.f32.mrb[0].mxu0
      %v1539 = vadd.f32 %v1442, %v1538
      %v1540 = vpop.f32.mrb[0].mxu0
      %v1541 = vpop.f32.mrb[0].mxu0
      %v1542 = vadd.f32 %v1445, %v1541
      %v1543 = vpop.f32.mrb[0].mxu0
      %1544 = vmatprep.mubr.bf16.mxu0 0
      %1545 = vmatmul.mubr.bf16.gmra.mrb[0].mxu0 %v457
      %v1546 = vpop.f32.mrb[0].mxu0
      %v1547 = vadd.f32 %v1450, %v1546
      %v1548 = vpop.f32.mrb[0].mxu0
      %v1549 = vpop.f32.mrb[0].mxu0
      %v1550 = vadd.f32 %v1453, %v1549
      %v1551 = vpop.f32.mrb[0].mxu0
      %1552 = vmatprep.mubr.bf16.mxu0 0
      %1553 = vmatmul.mubr.bf16.gmra.mrb[0].mxu0 %v460
      %v1554 = vpop.f32.mrb[0].mxu0
      %v1555 = vadd.f32 %v1458, %v1554
      %v1556 = vpop.f32.mrb[0].mxu0
      %v1557 = vpop.f32.mrb[0].mxu0
      %v1558 = vadd.f32 %v1461, %v1557
      %v1559 = vpop.f32.mrb[0].mxu0
      %1560 = vmatprep.mubr.bf16.mxu0 0
      %1561 = vmatmul.mubr.bf16.gmra.mrb[0].mxu0 %v463
      %v1562 = vpop.f32.mrb[0].mxu0
      %v1563 = vadd.f32 %v1466, %v1562
      %v1564 = vpop.f32.mrb[0].mxu0
      %v1565 = vpop.f32.mrb[0].mxu0
      %v1566 = vadd.f32 %v1469, %v1565
      %v1567 = vpop.f32.mrb[0].mxu0
      %1568 = vmatprep.mubr.bf16.mxu0 0
      %1569 = vmatmul.mubr.bf16.gmra.mrb[0].mxu0 %v496
      %v1570 = vpop.f32.mrb[0].mxu0
      %v1571 = vadd.f32 %v1474, %v1570
      %v1572 = vpop.f32.mrb[0].mxu0
      %v1573 = vpop.f32.mrb[0].mxu0
      %v1574 = vadd.f32 %v1477, %v1573
      %v1575 = vpop.f32.mrb[0].mxu0
      %1576 = vmatprep.mubr.bf16.mxu0 0
      %1577 = vmatmul.mubr.bf16.gmra.mrb[0].mxu0 %v522
      %v1578 = vpop.f32.mrb[0].mxu0
      %v1579 = vadd.f32 %v1482, %v1578
      %v1580 = vpop.f32.mrb[0].mxu0
      %v1581 = vpop.f32.mrb[0].mxu0
      %v1582 = vadd.f32 %v1485, %v1581
      %v1583 = vpop.f32.mrb[0].mxu0
      %1584 = vdwg.mxu0
      %1585 = vst [vmem:[%s221] sm:$0xff] %v1523
      %1586 = vst [vmem:[%s221 + $0x8] sm:$0xff] %v1526
      %1587 = vst [vmem:[%s221 + $0x10] sm:$0xff] %v1531
      %1588 = vst [vmem:[%s221 + $0x18] sm:$0xff] %v1534
      %1589 = vst [vmem:[%s221 + $0x20] sm:$0xff] %v1539
      %1590 = vst [vmem:[%s221 + $0x28] sm:$0xff] %v1542
      %1591 = vst [vmem:[%s221 + $0x30] sm:$0xff] %v1547
      %1592 = vst [vmem:[%s221 + $0x38] sm:$0xff] %v1550
      %1593 = vst [vmem:[%s221 + $0x40] sm:$0xff] %v1555
      %1594 = vst [vmem:[%s221 + $0x48] sm:$0xff] %v1558
      %1595 = vst [vmem:[%s221 + $0x50] sm:$0xff] %v1563
      %1596 = vst [vmem:[%s221 + $0x58] sm:$0xff] %v1566
      %1597 = vst [vmem:[%s221 + $0x60] sm:$0xff] %v1571
      %1598 = vst [vmem:[%s221 + $0x68] sm:$0xff] %v1574
      %1599 = vst [vmem:[%s221 + $0x70] sm:$0xff] %v1579
      %1600 = vst [vmem:[%s221 + $0x78] sm:$0xff] %v1582
      %v1601 = vadd.f32 %v1523, %v1526
      %v1602 = vadd.f32 %v1601, %v1531
      %v1603 = vadd.f32 %v1602, %v1534
      %v1604 = vadd.f32 %v1603, %v1539
      %v1605 = vadd.f32 %v1604, %v1542
      %v1606 = vadd.f32 %v1605, %v1547
      %v1607 = vadd.f32 %v1606, %v1550
      %v1608 = vadd.f32 %v1607, %v1555
      %v1609 = vadd.f32 %v1608, %v1558
      %v1610 = vadd.f32 %v1609, %v1563
      %v1611 = vadd.f32 %v1610, %v1566
      %v1612 = vadd.f32 %v1611, %v1571
      %v1613 = vadd.f32 %v1612, %v1574
      %v1614 = vadd.f32 %v1613, %v1579
      %v1615 = vadd.f32 %v1614, %v1582
      %v1616 = vrot.slane %v1615, 4
      %v1617 = vadd.f32 %v1615, %v1616
      %v1618 = vrot.slane %v1617, 2
      %v1619 = vadd.f32 %v1617, %v1618
      %v1620 = vrot.slane %v1619, 1
      %v1621 = vadd.f32 %v1619, %v1620
      %v1622 = vmul.f32 %v1523, %v1523
      %v1623 = vmul.f32 %v1526, %v1526
      %v1624 = vmul.f32 %v1531, %v1531
      %v1625 = vmul.f32 %v1534, %v1534
      %v1626 = vmul.f32 %v1539, %v1539
      %v1627 = vmul.f32 %v1542, %v1542
      %v1628 = vmul.f32 %v1547, %v1547
      %v1629 = vmul.f32 %v1550, %v1550
      %v1630 = vmul.f32 %v1555, %v1555
      %v1631 = vmul.f32 %v1558, %v1558
      %v1632 = vmul.f32 %v1563, %v1563
      %v1633 = vmul.f32 %v1566, %v1566
      %v1634 = vmul.f32 %v1571, %v1571
      %v1635 = vmul.f32 %v1574, %v1574
      %v1636 = vmul.f32 %v1579, %v1579
      %v1637 = vmul.f32 %v1582, %v1582
      %v1638 = vadd.f32 %v1622, %v1623
      %v1639 = vadd.f32 %v1638, %v1624
      %v1640 = vadd.f32 %v1639, %v1625
      %v1641 = vadd.f32 %v1640, %v1626
      %v1642 = vadd.f32 %v1641, %v1627
      %v1643 = vadd.f32 %v1642, %v1628
      %v1644 = vadd.f32 %v1643, %v1629
      %v1645 = vadd.f32 %v1644, %v1630
      %v1646 = vadd.f32 %v1645, %v1631
      %v1647 = vadd.f32 %v1646, %v1632
      %v1648 = vadd.f32 %v1647, %v1633
      %v1649 = vadd.f32 %v1648, %v1634
      %v1650 = vadd.f32 %v1649, %v1635
      %v1651 = vadd.f32 %v1650, %v1636
      %v1652 = vadd.f32 %v1651, %v1637
      %v1653 = vrot.slane %v1652, 4
      %v1654 = vadd.f32 %v1652, %v1653
      %v1655 = vrot.slane %v1654, 2
      %v1656 = vadd.f32 %v1654, %v1655
      %v1657 = vrot.slane %v1656, 1
      %v1658 = vadd.f32 %v1656, %v1657
      %vm1659 = vcmask 1040384
      %v1660 = vsel %vm1659, %v1621, %v1658
      %1661 = vst [vmem:[%s230] sm:$0x3] %v1660
      %s1662 = smul.u32 8, %s20
      %p1663 = scmp.lt.s32.totalorder %s19, 1
      %s1664 = scalar_select %p1663, %s19, 1
      %p1665 = scmp.lt.s32.totalorder %s1662, 15
      %s1666 = scalar_select %p1665, %s1662, 15
      %s1667 = smul.addr %s1666, 2
      %s1668 = smul.addr %s1664, 32
      %s1669 = sadd.s32 %s1667, %s1668
      %s1670 = smul.addr %s1669, 8
      %s1671 = scalar_lea.vmem %s2, %s1670
      %p1672 = scmp.lt.s32.totalorder %s19, 1
      %s1673 = scalar_select %p1672, %s19, 1
      %p1674 = scmp.lt.s32.totalorder %s20, 1
      %s1675 = scalar_select %p1674, %s20, 1
      %s1676 = smul.addr %s1673, 2
      %s1677 = sadd.s32 %s1675, %s1676
      %s1678 = smul.addr %s1677, 2
      %s1679 = scalar_lea.vmem %s3, %s1678
      // Predicated region
      $region29: #{conv_block_forward.4} parent=27 // pred_check
        %p1680 = pneg %p96
      $region30: #{conv_block_forward.4} parent=27 // pred_check_branch
        %1682 = sbr.rel (%p1680) target = $region32
      $region31: #{conv_block_forward.4} parent=27 // pred_region
        %s1683 = smul.u32 8, %s20
      $region32: #{conv_block_forward.4} parent=27 // pred_fallthru
        _
      // Predicated region
      $region33: #{conv_block_forward.4} parent=27 // pred_check
        %p1684 = pneg %p124
      $region34: #{conv_block_forward.4} parent=27 // pred_check_branch
        %1686 = sbr.rel (%p1684) target = $region36
      $region35: #{conv_block_forward.4} parent=27 // pred_region
        _
      $region36: #{conv_block_forward.4} parent=27 // pred_fallthru
        _
    $region28: #{conv_block_forward.4} parent=5 // pred_fallthru
      _
    %p1687 = scmp.le.s32.totalorder 2, %s10
    // Predicated region
    $region37: #{conv_block_forward.4} parent=5 // pred_check
      %p1688 = pneg %p1687
    $region38: #{conv_block_forward.4} parent=5 // pred_check_branch
      %1690 = sbr.rel (%p1688) target = $region40
    $region39: #{conv_block_forward.4} parent=5 // pred_region
      %s1691 = ssub.s32 %s10, 2
      // Predicated region
      $region41: #{conv_block_forward.4} parent=39 // pred_check
        %p1692 = pneg %p102
      $region42: #{conv_block_forward.4} parent=39 // pred_check_branch
        %1694 = sbr.rel (%p1692) target = $region44
      $region43: #{conv_block_forward.4} parent=39 // pred_region
        %s1695 = smul.u32 8, %s22
        %p1696 = scmp.lt.s32.totalorder %s21, 1
        %s1697 = scalar_select %p1696, %s21, 1
        %p1698 = scmp.lt.s32.totalorder %s1695, 15
        %s1699 = scalar_select %p1698, %s1695, 15
        %s1700 = smul.addr %s1699, 2
        %s1701 = smul.addr %s1697, 32
        %s1702 = sadd.s32 %s1700, %s1701
        %s1703 = smul.addr %s1702, 8
        %s1704 = scalar_lea.vmem %s2, %s1703
      $region44: #{conv_block_forward.4} parent=39 // pred_fallthru
        _
      // Predicated region
      $region45: #{conv_block_forward.4} parent=39 // pred_check
        %p1705 = pneg %p130
      $region46: #{conv_block_forward.4} parent=39 // pred_check_branch
        %1707 = sbr.rel (%p1705) target = $region48
      $region47: #{conv_block_forward.4} parent=39 // pred_region
        %p1708 = scmp.lt.s32.totalorder %s21, 1
        %s1709 = scalar_select %p1708, %s21, 1
        %p1710 = scmp.lt.s32.totalorder %s22, 1
        %s1711 = scalar_select %p1710, %s22, 1
        %s1712 = smul.addr %s1709, 2
        %s1713 = sadd.s32 %s1711, %s1712
        %s1714 = smul.addr %s1713, 2
        %s1715 = scalar_lea.vmem %s3, %s1714
      $region48: #{conv_block_forward.4} parent=39 // pred_fallthru
        _
    $region40: #{conv_block_forward.4} parent=5 // pred_fallthru
      _
  $region6: #{conv_block_forward.4} parent=0 // loop_footer
    %s14 = sadd.s32 1, %s10
  $region7: #{conv_block_forward.4} parent=0 // loop_footer_branch
    %9 = sbr.rel target = $region3
  $region8: #{conv_block_forward.4} parent=0 // loop_exit
    _

</llo_original>
